<compile_context>
chip_gen: v7x
topology: tpu7x:2x2x1
jax: 0.10.0
libtpu: 0.0.40
codegen_flags: <defaults>
</compile_context>

<pallas_src>
import functools
import math

import jax
import jax.numpy as jnp
from jax.experimental import pallas as pl
from jax.experimental.pallas import tpu as pltpu


# -----------------------------------------------------------------------------
# helpers
# -----------------------------------------------------------------------------
def _round_up(x, m):
    return ((x + m - 1) // m) * m


def _pick_tile(total, candidates):
    for c in candidates:
        if total % c == 0:
            return c
    return total


# -----------------------------------------------------------------------------
# Fused DecoderMLP kernel.
#   refs layout: z, W_0..W_{L-1}, [b_0..b_{L-1}], out, h_0..h_{L-2}
#   grid = (batch_tiles, out_tiles); hidden chain computed once per batch tile.
# -----------------------------------------------------------------------------
def _fused_decoder_mlp_kernel(*refs, num_layers, use_bias, activation):
    nin = 1 + num_layers * (2 if use_bias else 1)
    z_ref = refs[0]
    w_refs = refs[1:1 + num_layers]
    b_refs = refs[1 + num_layers:nin] if use_bias else (None,) * num_layers
    o_ref = refs[nin]
    h_refs = refs[nin + 1:]

    j = pl.program_id(1)

    def act(y):
        if activation == "relu":
            return jnp.maximum(y, 0.0)
        if activation == "sigmoid":
            return jax.nn.sigmoid(y)
        return y

    # Hidden layers depend only on the batch tile -> compute once (j == 0),
    # keep results resident in VMEM scratch across all output tiles.
    @pl.when(j == 0)
    def _():
        x = z_ref[...].astype(jnp.bfloat16)
        for l in range(num_layers - 1):
            y = jnp.dot(x, w_refs[l][...], preferred_element_type=jnp.float32)
            if use_bias:
                y = y + b_refs[l][...]          # (1, D) broadcast, f32 epilogue
            y = act(y)                          # activation only on non-final layers
            h_refs[l][...] = y.astype(h_refs[l].dtype)
            x = h_refs[l][...]

    # Final layer: one output tile (bm, bn) per grid step, lane-dense store.
    if num_layers > 1:
        x_last = h_refs[num_layers - 2][...]
    else:
        x_last = z_ref[...].astype(jnp.bfloat16)
    y = jnp.dot(x_last, w_refs[num_layers - 1][...],
                preferred_element_type=jnp.float32)
    if use_bias:
        y = y + b_refs[num_layers - 1][...]
    # No activation after the last layer (matches DecoderMLP.forward).
    o_ref[...] = y.astype(o_ref.dtype)


# -----------------------------------------------------------------------------
# Wrapper: padding, tiling and the single pallas_call.
#   weights: list of (in, out) arrays; biases: optional list of (1, out) arrays.
# -----------------------------------------------------------------------------
def decoder_mlp_forward(z, weights, biases=None, activation=None):
    use_bias = biases is not None
    num_layers = len(weights)
    dims = [weights[0].shape[0]] + [w.shape[1] for w in weights]
    batch = z.shape[0]
    n_out = dims[-1]

    # batch tiling: pad rows to a multiple of 8 sublanes
    m_pad = _round_up(batch, 8)
    bm = _pick_tile(m_pad, (256, 128, 64, 32, 16, 8))

    # lane-dense output tiling: pad final dim to a multiple of 128
    n_pad = _round_up(n_out, 128)
    bn = _pick_tile(n_pad, (512, 256, 128))

    # bf16 operands for the MXU; f32 accumulate + epilogue inside the kernel.
    z_p = jnp.zeros((m_pad, dims[0]), jnp.bfloat16).at[:batch].set(
        z.astype(jnp.bfloat16))
    ws = [w.astype(jnp.bfloat16) for w in weights]
    w_last = jnp.zeros((dims[-2], n_pad), jnp.bfloat16).at[:, :n_out].set(ws[-1])
    ws = ws[:-1] + [w_last]

    inputs = [z_p] + ws
    in_specs = [pl.BlockSpec((bm, dims[0]), lambda i, j: (i, 0))]
    for l in range(num_layers - 1):
        in_specs.append(pl.BlockSpec((dims[l], dims[l + 1]), lambda i, j: (0, 0)))
    in_specs.append(pl.BlockSpec((dims[-2], bn), lambda i, j: (0, j)))

    if use_bias:
        bs = [b.reshape(1, -1).astype(jnp.float32) for b in biases]
        b_last = jnp.zeros((1, n_pad), jnp.float32).at[:, :n_out].set(bs[-1])
        bs = bs[:-1] + [b_last]
        inputs += bs
        for l in range(num_layers - 1):
            in_specs.append(pl.BlockSpec((1, dims[l + 1]), lambda i, j: (0, 0)))
        in_specs.append(pl.BlockSpec((1, bn), lambda i, j: (0, j)))

    out = pl.pallas_call(
        functools.partial(_fused_decoder_mlp_kernel,
                          num_layers=num_layers,
                          use_bias=use_bias,
                          activation=activation),
        out_shape=jax.ShapeDtypeStruct((m_pad, n_pad), jnp.float32),
        grid_spec=pltpu.PrefetchScalarGridSpec(
            num_scalar_prefetch=0,
            grid=(m_pad // bm, n_pad // bn),
            in_specs=in_specs,
            out_specs=pl.BlockSpec((bm, bn), lambda i, j: (i, j)),
            scratch_shapes=[pltpu.VMEM((bm, dims[l + 1]), jnp.bfloat16)
                            for l in range(num_layers - 1)]),
        compiler_params=pltpu.CompilerParams(
            dimension_semantics=("parallel", "arbitrary"),
            vmem_limit_bytes=32 * 1024 * 1024),
    )(*inputs)

    return out[:batch, :n_out]


# -----------------------------------------------------------------------------
# Pure-JAX f32 reference (matches DecoderMLP.forward with dropout p=0).
# -----------------------------------------------------------------------------
def decoder_mlp_reference(z, weights, biases=None, activation=None):
    hid = z
    n = len(weights)
    for i, w in enumerate(weights):
        hid = hid @ w
        if biases is not None:
            hid = hid + biases[i]
        if i < n - 1 and activation is not None:
            hid = jnp.maximum(hid, 0.0) if activation == "relu" else jax.nn.sigmoid(hid)
    return hid


# -----------------------------------------------------------------------------
# Deterministic parameter construction (synthetic weights, no checkpoints).
# -----------------------------------------------------------------------------
def make_decoder_params(key, decoder_dims, use_bias):
    weights, biases = [], []
    for i in range(len(decoder_dims) - 1):
        key, kw, kb = jax.random.split(key, 3)
        fan_in, fan_out = decoder_dims[i], decoder_dims[i + 1]
        bound = 1.0 / math.sqrt(fan_in)
        weights.append(
            jax.random.uniform(kw, (fan_in, fan_out), jnp.float32, -bound, bound))
        if use_bias:
            biases.append(
                jax.random.uniform(kb, (1, fan_out), jnp.float32, -bound, bound))
    return weights, (biases if use_bias else None), key


if __name__ == "__main__":
    key = jax.random.PRNGKey(0)

    # --- Default DecoderMLP config: dims [20, 1024, 2000], bias=False, no activation
    decoder_dims = [20, 1024, 2000]
    batch = 8
    weights, _, key = make_decoder_params(key, decoder_dims, use_bias=False)
    key, kz = jax.random.split(key)
    z = jax.random.normal(kz, (batch, decoder_dims[0]), jnp.float32)

    out = decoder_mlp_forward(z, weights, biases=None, activation=None)
    jax.block_until_ready(out)
    ref = decoder_mlp_reference(z, weights)
    assert out.shape == (batch, decoder_dims[-1])
    assert jnp.allclose(out, ref, rtol=5e-2, atol=5e-2)

    # --- Optional branches: bias=True, relu activation, non-multiple-of-8 batch
    dims2 = [20, 128, 256]
    batch2 = 4
    w2, b2, key = make_decoder_params(key, dims2, use_bias=True)
    key, kz2 = jax.random.split(key)
    z2 = jax.random.normal(kz2, (batch2, dims2[0]), jnp.float32)
    out2 = decoder_mlp_forward(z2, w2, biases=b2, activation="relu")
    jax.block_until_ready(out2)
    ref2 = decoder_mlp_reference(z2, w2, biases=b2, activation="relu")
    assert out2.shape == (batch2, dims2[-1])
    assert jnp.allclose(out2, ref2, rtol=5e-2, atol=5e-2)

    print("KERNEL_OK")
</pallas_src>

<mosaic_0001>
module attributes {stable_mosaic.version = 11 : i64} {
  func.func @_fused_decoder_mlp_kernel(%arg0: i32, %arg1: i32, %arg2: memref<8x20xbf16, #tpu.memory_space<vmem>>, %arg3: memref<20x1024xbf16, #tpu.memory_space<vmem>>, %arg4: memref<1024x512xbf16, #tpu.memory_space<vmem>>, %arg5: memref<8x512xf32, #tpu.memory_space<vmem>>, %arg6: memref<8x1024xbf16, #tpu.memory_space<vmem>>) attributes {dimension_semantics = [#tpu.dimension_semantics<parallel>, #tpu.dimension_semantics<arbitrary>], iteration_bounds = array<i64: 1, 4>, scalar_prefetch = 0 : i64, scratch_operands = 1 : i64, tpu.core_type = #tpu.core_type<tc>, window_params = [{transform_indices = @transform_0, window_bounds = array<i64: 8, 20>}, {pipeline_mode = #tpu.pipeline_mode<synchronous>, transform_indices = @transform_1, window_bounds = array<i64: 20, 1024>}, {transform_indices = @transform_2, window_bounds = array<i64: 1024, 512>}, {transform_indices = @transform_3, window_bounds = array<i64: 8, 512>}]} {
    %c0_i32 = arith.constant 0 : i32
    %0 = arith.cmpi eq, %arg1, %c0_i32 : i32
    %1 = arith.extui %0 : i1 to i32
    %c0_i32_0 = arith.constant 0 : i32
    %2 = arith.cmpi ne, %1, %c0_i32_0 : i32
    scf.if %2 {
      %c0_6 = arith.constant 0 : index
      %c0_7 = arith.constant 0 : index
      %7 = vector.load %arg2[%c0_6, %c0_7] : memref<8x20xbf16, #tpu.memory_space<vmem>>, vector<8x20xbf16>
      %c0_8 = arith.constant 0 : index
      %c0_9 = arith.constant 0 : index
      %8 = vector.load %arg3[%c0_8, %c0_9] : memref<20x1024xbf16, #tpu.memory_space<vmem>>, vector<20x1024xbf16>
      %cst_10 = arith.constant dense<0.000000e+00> : vector<8x1024xf32>
      %9 = tpu.matmul %7, %8, %cst_10 {dimension_numbers = #tpu.dot_dimension_numbers<[1], [0], [0], [1], [0, 0, 1, 1], [], []>} : vector<8x20xbf16>, vector<20x1024xbf16>, vector<8x1024xf32> -> vector<8x1024xf32>
      %10 = arith.truncf %9 : vector<8x1024xf32> to vector<8x1024xbf16>
      %c0_11 = arith.constant 0 : index
      %c0_12 = arith.constant 0 : index
      %11 = vector.load %arg6[%c0_11, %c0_12] : memref<8x1024xbf16, #tpu.memory_space<vmem>>, vector<8x1024xbf16>
      tpu.vector_store %arg6[%c0_11, %c0_12], %10 {strides = array<i32>} : memref<8x1024xbf16, #tpu.memory_space<vmem>>, vector<8x1024xbf16>,
    } else {
    }
    %c0 = arith.constant 0 : index
    %c0_1 = arith.constant 0 : index
    %3 = vector.load %arg6[%c0, %c0_1] : memref<8x1024xbf16, #tpu.memory_space<vmem>>, vector<8x1024xbf16>
    %c0_2 = arith.constant 0 : index
    %c0_3 = arith.constant 0 : index
    %4 = vector.load %arg4[%c0_2, %c0_3] : memref<1024x512xbf16, #tpu.memory_space<vmem>>, vector<1024x512xbf16>
    %cst = arith.constant dense<0.000000e+00> : vector<8x512xf32>
    %5 = tpu.matmul %3, %4, %cst {dimension_numbers = #tpu.dot_dimension_numbers<[1], [0], [0], [1], [0, 0, 1, 1], [], []>} : vector<8x1024xbf16>, vector<1024x512xbf16>, vector<8x512xf32> -> vector<8x512xf32>
    %c0_4 = arith.constant 0 : index
    %c0_5 = arith.constant 0 : index
    %6 = vector.load %arg5[%c0_4, %c0_5] : memref<8x512xf32, #tpu.memory_space<vmem>>, vector<8x512xf32>
    tpu.vector_store %arg5[%c0_4, %c0_5], %5 {strides = array<i32>} : memref<8x512xf32, #tpu.memory_space<vmem>>, vector<8x512xf32>,
    return
  }
  func.func @transform_0(%arg0: i32, %arg1: i32) -> (i32, i32) {
    %c0_i32 = arith.constant 0 : i32
    %c0_i32_0 = arith.constant 0 : i32
    return %arg0, %c0_i32 : i32, i32
  }
  func.func @transform_1(%arg0: i32, %arg1: i32) -> (i32, i32) {
    %c0_i32 = arith.constant 0 : i32
    %c0_i32_0 = arith.constant 0 : i32
    %c0_i32_1 = arith.constant 0 : i32
    return %c0_i32, %c0_i32_0 : i32, i32
  }
  func.func @transform_2(%arg0: i32, %arg1: i32) -> (i32, i32) {
    %c0_i32 = arith.constant 0 : i32
    %c0_i32_0 = arith.constant 0 : i32
    return %c0_i32, %arg1 : i32, i32
  }
  func.func @transform_3(%arg0: i32, %arg1: i32) -> (i32, i32) {
    %c0_i32 = arith.constant 0 : i32
    return %arg0, %arg1 : i32, i32
  }
}

</mosaic_0001>

<llo_original>
// kernel: tpu_custom_call.1
$region0: #{tpu_custom_call.1}
  #allocation0 [shape = 'u32[]', space=smem, size = 0x4, offset = 0x4, fixed_abs, tag = 'smem constant byte address 0x4 - core index']
  #allocation1 [shape = 'u32[144,128]{1,0:T(1,128)}', space=vmem, size = 0x12000, scoped, tag = 'internal scratch']
  #allocation2 [shape = 'bf16[8,1024]{1,0:T(8,128)(2,1)}', space=vmem, size = 0x4000, scoped, tag = 'scratch operand']
  %s0 = inlined_call_operand.hbm [shape: bf16[8,20], index: 0, kind: input, shape index: {}]
  %s1 = inlined_call_operand.hbm [shape: bf16[20,1024], index: 1, kind: input, shape index: {}]
  %s2 = inlined_call_operand.hbm [shape: bf16[1024,2048], index: 2, kind: input, shape index: {}]
  %s3 = inlined_call_operand.hbm [shape: f32[8,2048], index: 3, kind: output, shape index: {}]
  %s4 = sld [smem:[#allocation0]]
  $region61: #{tpu_custom_call.1} parent=0
    _
  %s6 = ssub.s32 1, %s4
  %s7 = scalar_select 0, %s6, %s4
  $region1: #{tpu_custom_call.1} parent=0
    #allocation3 [shape = 'u8[2048]{0}', space=vmem, size = 0x800, scoped, tag = 'input window, operand 0, single buffered']
    #allocation4 [shape = 's32[2]{0}', space=sflag, size = 0x8, scoped, tag = 'scoped memory for tpu_custom_call.1']
    #allocation5 [shape = 's32[2]{0}', space=sflag, size = 0x8, scoped, tag = 'scoped memory for tpu_custom_call.1']
    #allocation6 [shape = 'u8[49152]{0}', space=vmem, size = 0xc000, scoped, tag = 'input window, operand 1, single buffered']
    #allocation7 [shape = 's32[1]{0}', space=sflag, size = 0x4, scoped, tag = 'scoped memory for tpu_custom_call.1']
    #allocation8 [shape = 'u8[2097152]{0}', space=vmem, size = 0x200000, scoped, tag = 'input window, operand 2']
    #allocation9 [shape = 'u8[32768]{0}', space=vmem, size = 0x8000, scoped, tag = 'output window, operand 0']
    %8 = vsyncpa [#allocation4], 0
    %9 = vsyncpa [#allocation7], 0
    %10 = vsyncpa [#allocation5], 0
    %s11 = scalar_lea.sflag [#allocation5], 1
    %12 = vsyncpa %s11, 0
    loop: start=0, step=1, limit=6
    $region2: #{tpu_custom_call.1} parent=1 // loop_pre_header
      _
    $region3: #{tpu_custom_call.1} parent=1 // loop_header
      %s14 = sphi 0, %s18
      %p15 = scmp.ge.s32.totalorder %s14, 6
      %s21 = sphi 0, %s33
      %s22 = sphi 0, %s29
      %s23 = sphi 0, %s21
      %s24 = sphi 0, %s22
      %s25 = sphi 0, %s23
      %s26 = sphi 0, %s24
      %s36 = sphi 0, %s38
      %s39 = sphi 0, %s36
      %s40 = sphi 0, %s39
      %s56 = sphi 0, %s40
      %s60 = sphi 0, %s60
      %s62 = sphi 0, %s60
      %s63 = sphi 0, %s62
      %s77 = sphi 0, %s63
      %s83 = sphi 0, %s85
      %s86 = sphi 0, %s83
      %s87 = sphi 0, %s86
      %s103 = sphi 0, %s87
      %s111 = sphi 0, %s113
      %s114 = sphi 0, %s111
      %s115 = sphi 0, %s114
      %s131 = sphi 0, %s115
    $region4: #{tpu_custom_call.1} parent=1 // loop_header_branch
      %17 = sbr.rel (%p15) target = $region8
    $region5: #{tpu_custom_call.1} parent=1 // loop_body
      %s19 = ssub.s32 %s14, 1
      %s20 = ssub.s32 %s14, 2
      %s27 = sadd.s32 1, %s22
      %p28 = scmp.ge.s32.totalorder %s27, 4
      %s29 = scalar_select %p28, 0, %s27
      %s30 = sadd.s32 1, %s21
      %s31 = scalar_select %p28, %s30, %s21
      %p32 = scmp.ge.s32.totalorder %s31, 1
      %s33 = scalar_select %p32, 0, %s31
      %s34 = ssub.s32 %s21, %s33
      %p35 = scmp.eq.s32.totalorder %s34, 0
      %s37 = sadd.s32 %s36, 1
      %s38 = scalar_select %p35, %s36, %s37
      %p41 = pneg %p35
      %p42 = scmp.eq.s32.totalorder %s14, 3
      %p43 = por %p41, %p42
      %p44 = scmp.ne.s32.totalorder %s36, %s39
      %p45 = scmp.eq.s32.totalorder %s14, 0
      %p46 = por %p44, %p45
      %p47 = scmp.ne.s32.totalorder %s36, %s39
      %p48 = scmp.eq.s32.totalorder %s19, 3
      %p49 = por %p47, %p48
      %p50 = scmp.ne.s32.totalorder %s39, %s40
      %p51 = scmp.eq.s32.totalorder %s19, 0
      %p52 = por %p50, %p51
      %p53 = scmp.ne.s32.totalorder %s39, %s40
      %p54 = scmp.eq.s32.totalorder %s20, 3
      %p55 = por %p53, %p54
      %p57 = scmp.ne.s32.totalorder %s40, %s56
      %p58 = scmp.eq.s32.totalorder %s20, 0
      %p59 = por %p57, %p58
      %s61 = sadd.s32 %s60, 1
      %p64 = scmp.eq.s32.totalorder %s14, 3
      %p65 = scmp.ne.s32.totalorder %s60, %s62
      %p66 = scmp.eq.s32.totalorder %s14, 0
      %p67 = por %p65, %p66
      %p68 = scmp.ne.s32.totalorder %s60, %s62
      %p69 = scmp.eq.s32.totalorder %s19, 3
      %p70 = por %p68, %p69
      %p71 = scmp.ne.s32.totalorder %s62, %s63
      %p72 = scmp.eq.s32.totalorder %s19, 0
      %p73 = por %p71, %p72
      %p74 = scmp.ne.s32.totalorder %s62, %s63
      %p75 = scmp.eq.s32.totalorder %s20, 3
      %p76 = por %p74, %p75
      %p78 = scmp.ne.s32.totalorder %s63, %s77
      %p79 = scmp.eq.s32.totalorder %s20, 0
      %p80 = por %p78, %p79
      %s81 = ssub.s32 %s22, %s29
      %p82 = scmp.eq.s32.totalorder %s81, 0
      %s84 = sadd.s32 %s83, 1
      %s85 = scalar_select %p82, %s83, %s84
      %p88 = pneg %p82
      %p89 = scmp.eq.s32.totalorder %s14, 3
      %p90 = por %p88, %p89
      %p91 = scmp.ne.s32.totalorder %s83, %s86
      %p92 = scmp.eq.s32.totalorder %s14, 0
      %p93 = por %p91, %p92
      %p94 = scmp.ne.s32.totalorder %s83, %s86
      %p95 = scmp.eq.s32.totalorder %s19, 3
      %p96 = por %p94, %p95
      %p97 = scmp.ne.s32.totalorder %s86, %s87
      %p98 = scmp.eq.s32.totalorder %s19, 0
      %p99 = por %p97, %p98
      %p100 = scmp.ne.s32.totalorder %s86, %s87
      %p101 = scmp.eq.s32.totalorder %s20, 3
      %p102 = por %p100, %p101
      %p104 = scmp.ne.s32.totalorder %s87, %s103
      %p105 = scmp.eq.s32.totalorder %s20, 0
      %p106 = por %p104, %p105
      %s107 = ssub.s32 %s21, %s33
      %s108 = ssub.s32 %s22, %s29
      %s109 = sor.u32 %s107, %s108
      %p110 = scmp.eq.s32.totalorder %s109, 0
      %s112 = sadd.s32 %s111, 1
      %s113 = scalar_select %p110, %s111, %s112
      %p116 = pneg %p110
      %p117 = scmp.eq.s32.totalorder %s14, 3
      %p118 = por %p116, %p117
      %p119 = scmp.ne.s32.totalorder %s111, %s114
      %p120 = scmp.eq.s32.totalorder %s14, 0
      %p121 = por %p119, %p120
      %p122 = scmp.ne.s32.totalorder %s111, %s114
      %p123 = scmp.eq.s32.totalorder %s19, 3
      %p124 = por %p122, %p123
      %p125 = scmp.ne.s32.totalorder %s114, %s115
      %p126 = scmp.eq.s32.totalorder %s19, 0
      %p127 = por %p125, %p126
      %p128 = scmp.ne.s32.totalorder %s114, %s115
      %p129 = scmp.eq.s32.totalorder %s20, 3
      %p130 = por %p128, %p129
      %p132 = scmp.ne.s32.totalorder %s115, %s131
      %p133 = scmp.eq.s32.totalorder %s20, 0
      %p134 = por %p132, %p133
      %p135 = scmp.le.s32.totalorder 1, %s14
      %p136 = scmp.lt.s32.totalorder %s14, 5
      %p137 = pnand %p135, %p136
      %p138 = pneg %p137
      // Predicated region
      $region9: #{tpu_custom_call.1} parent=5 // pred_check
        _
      $region10: #{tpu_custom_call.1} parent=5 // pred_check_branch
        %140 = sbr.rel (%p137) target = $region12
      $region11: #{tpu_custom_call.1} parent=5 // pred_region
        %s141 = ssub.s32 %s14, 1
        // Predicated region
        $region13: #{tpu_custom_call.1} parent=11 // pred_check
          %p142 = pneg %p52
        $region14: #{tpu_custom_call.1} parent=11 // pred_check_branch
          %144 = sbr.rel (%p142) target = $region16
        $region15: #{tpu_custom_call.1} parent=11 // pred_region
          %s146 = ssub.s32 64, 64
          %147 = vsyncadd [#allocation4], %s146
          %s148 = smul.addr %s23, 64
          %s149 = scalar_lea.hbm %s0, %s148
          %s151 = sshll.u32 [#allocation3], 4
          %s152 = int_to_ptr.vmem [resolvable:$true] %s151
          %154 = dma.hbm_to_vmem [thread:$0]  %s149, 64, %s152, [#allocation4]
        $region16: #{tpu_custom_call.1} parent=11 // pred_fallthru
          _
        // Predicated region
        $region17: #{tpu_custom_call.1} parent=11 // pred_check
          %p155 = pneg %p73
        $region18: #{tpu_custom_call.1} parent=11 // pred_check_branch
          %157 = sbr.rel (%p155) target = $region20
        $region19: #{tpu_custom_call.1} parent=11 // pred_region
          %s159 = ssub.s32 1536, 1536
          %160 = vsyncadd [#allocation7], %s159
          %s161 = sshll.u32 [#allocation6], 4
          %s162 = int_to_ptr.vmem [resolvable:$true] %s161
          %167 = dma.hbm_to_vmem [thread:$0]  %s1, 1536, %s162, [#allocation7], 512, 512, 32
        $region20: #{tpu_custom_call.1} parent=11 // pred_fallthru
          _
      $region12: #{tpu_custom_call.1} parent=5 // pred_fallthru
        _
      %p168 = scmp.lt.s32.totalorder %s14, 4
      // Predicated region
      $region21: #{tpu_custom_call.1} parent=5 // pred_check
        %p169 = pneg %p168
      $region22: #{tpu_custom_call.1} parent=5 // pred_check_branch
        %171 = sbr.rel (%p169) target = $region24
      $region23: #{tpu_custom_call.1} parent=5 // pred_region
        // Predicated region
        $region25: #{tpu_custom_call.1} parent=23 // pred_check
          %p172 = pneg %p93
        $region26: #{tpu_custom_call.1} parent=23 // pred_check_branch
          %174 = sbr.rel (%p172) target = $region28
        $region27: #{tpu_custom_call.1} parent=23 // pred_region
          %s175 = sand.u32 %s14, 1
          %s176 = scalar_lea.sflag [#allocation4], %s175
          %s177 = sand.u32 %s83, 1
          %s178 = smul.addr %s177, 2048
          %s179 = scalar_lea.vmem [#allocation8], %s178
          %s180 = smul.u32 4, %s22
          %s182 = ssub.s32 32768, 32768
          %183 = vsyncadd %s176, %s182
          %s184 = smul.addr %s180, 64
          %s185 = scalar_lea.hbm %s2, %s184
          %s186 = sshll.u32 %s179, 4
          %s187 = int_to_ptr.vmem [resolvable:$true] %s186
          %192 = dma.hbm_to_vmem [thread:$0]  %s185, 32768, %s187, %s176, 1024, 256, 16
        $region28: #{tpu_custom_call.1} parent=23 // pred_fallthru
          _
      $region24: #{tpu_custom_call.1} parent=5 // pred_fallthru
        _
      %p193 = scmp.le.s32.totalorder 1, %s14
      %p194 = scmp.lt.s32.totalorder %s14, 5
      %p195 = pnand %p193, %p194
      %p196 = pneg %p195
      // Predicated region
      $region29: #{tpu_custom_call.1} parent=5 // pred_check
        _
      $region30: #{tpu_custom_call.1} parent=5 // pred_check_branch
        %198 = sbr.rel (%p195) target = $region32
      $region31: #{tpu_custom_call.1} parent=5 // pred_region
        %s199 = ssub.s32 %s14, 1
        // Predicated region
        $region33: #{tpu_custom_call.1} parent=31 // pred_check
          %p200 = pneg %p52
        $region34: #{tpu_custom_call.1} parent=31 // pred_check_branch
          %202 = sbr.rel (%p200) target = $region36
        $region35: #{tpu_custom_call.1} parent=31 // pred_region
          %203 = dma.done [#allocation4], 64
        $region36: #{tpu_custom_call.1} parent=31 // pred_fallthru
          _
        // Predicated region
        $region37: #{tpu_custom_call.1} parent=31 // pred_check
          %p204 = pneg %p73
        $region38: #{tpu_custom_call.1} parent=31 // pred_check_branch
          %206 = sbr.rel (%p204) target = $region40
        $region39: #{tpu_custom_call.1} parent=31 // pred_region
          %207 = dma.done [#allocation7], 1536
        $region40: #{tpu_custom_call.1} parent=31 // pred_fallthru
          _
        %s208 = sand.u32 %s19, 1
        %s209 = scalar_lea.sflag [#allocation4], %s208
        %s210 = sand.u32 %s86, 1
        %s211 = smul.addr %s210, 2048
        %s212 = scalar_lea.vmem [#allocation8], %s211
        // Predicated region
        $region41: #{tpu_custom_call.1} parent=31 // pred_check
          %p213 = pneg %p99
        $region42: #{tpu_custom_call.1} parent=31 // pred_check_branch
          %215 = sbr.rel (%p213) target = $region44
        $region43: #{tpu_custom_call.1} parent=31 // pred_region
          %216 = dma.done %s209, 32768
        $region44: #{tpu_custom_call.1} parent=31 // pred_fallthru
          _
        %p217 = pneg %p52
        %p218 = pneg %p49
        %p219 = pneg %p73
        %p220 = pneg %p70
        %s221 = sand.u32 %s19, 1
        %s222 = scalar_lea.sflag [#allocation4], %s221
        %s223 = sand.u32 %s86, 1
        %s224 = smul.addr %s223, 2048
        %s225 = scalar_lea.vmem [#allocation8], %s224
        %p226 = pneg %p99
        %p227 = pneg %p96
        %p228 = pneg %p127
        %p229 = pneg %p124
        %s230 = sand.u32 %s114, 1
        %s231 = scalar_lea.sflag [#allocation5], %s230
        %s232 = sand.u32 %s114, 1
        %s233 = smul.addr %s232, 32
        %s234 = scalar_lea.vmem [#allocation9], %s233
        %s235 = smul.u32 4, %s24
        %s236 = smul.u32 4, %s24
        %p238 = scmp.eq.s32.totalorder %s24, 0
        // Predicated region
        $region45: #{tpu_custom_call.1} parent=31 // pred_check
          %p239 = pneg %p238
        $region46: #{tpu_custom_call.1} parent=31 // pred_check_branch
          %241 = sbr.rel (%p239) target = $region48
        $region47: #{tpu_custom_call.1} parent=31 // pred_region
          %v242 = vld [vmem:[#allocation3] sm:$0xf]
          %v243 = vld [vmem:[#allocation6] sm:$0xff]
          %v244 = vld [vmem:[#allocation6 + $0x8] sm:$0xff]
          %v245 = vld [vmem:[#allocation6 + $0x10] sm:$0xff]
          %v246 = vld [vmem:[#allocation6 + $0x18] sm:$0xff]
          %v247 = vld [vmem:[#allocation6 + $0x20] sm:$0xff]
          %v248 = vld [vmem:[#allocation6 + $0x28] sm:$0xff]
          %v249 = vld [vmem:[#allocation6 + $0x30] sm:$0xff]
          %v250 = vld [vmem:[#allocation6 + $0x38] sm:$0xff]
          %v251 = vld [vmem:[#allocation6 + $0x40] sm:$0x33]
          %v252 = vld [vmem:[#allocation6 + $0x48] sm:$0x33]
          %v253 = vld [vmem:[#allocation6 + $0x50] sm:$0x33]
          %v254 = vld [vmem:[#allocation6 + $0x58] sm:$0x33]
          %v267 = vunpack.c.l.b16 %v243
          %v268 = vunpack.c.h.b16 %v243
          %v269 = vunpack.c.l.b16 %v244
          %v270 = vunpack.c.h.b16 %v244
          %v271 = vunpack.c.l.b16 %v245
          %v272 = vunpack.c.h.b16 %v245
          %v273 = vunpack.c.l.b16 %v246
          %v274 = vunpack.c.h.b16 %v246
          %v275 = vunpack.c.l.b16 %v247
          %v276 = vunpack.c.h.b16 %v247
          %v277 = vunpack.c.l.b16 %v248
          %v278 = vunpack.c.h.b16 %v248
          %v279 = vunpack.c.l.b16 %v249
          %v280 = vunpack.c.h.b16 %v249
          %v281 = vunpack.c.l.b16 %v250
          %v282 = vunpack.c.h.b16 %v250
          %v283 = vunpack.c.l.b16 %v251
          %v284 = vunpack.c.h.b16 %v251
          %v285 = vunpack.c.l.b16 %v252
          %v286 = vunpack.c.h.b16 %v252
          %v287 = vunpack.c.l.b16 %v253
          %v288 = vunpack.c.h.b16 %v253
          %v289 = vunpack.c.l.b16 %v254
          %v290 = vunpack.c.h.b16 %v254
          %v291 = vpack.c.b16 %v275, %v267
          %v292 = vpack.c.b16 %v276, %v268
          %v293 = vpack.c.b16 %v277, %v269
          %v294 = vpack.c.b16 %v278, %v270
          %v295 = vpack.c.b16 %v279, %v271
          %v296 = vpack.c.b16 %v280, %v272
          %v297 = vpack.c.b16 %v281, %v273
          %v298 = vpack.c.b16 %v282, %v274
          %v299 = vpack.c.b16 %v283, %v283
          %v300 = vpack.c.b16 %v284, %v284
          %v301 = vpack.c.b16 %v285, %v285
          %v302 = vpack.c.b16 %v286, %v286
          %v303 = vpack.c.b16 %v287, %v287
          %v304 = vpack.c.b16 %v288, %v288
          %v305 = vpack.c.b16 %v289, %v289
          %v306 = vpack.c.b16 %v290, %v290
          %vm315 = vcmask 162816
          %v317 = vsel %vm315, %v242, 0
          %vm319 = vcmask 1041408
          %v321 = vsel %vm319, %v299, 0
          %v324 = vsel %vm319, %v300, 0
          %v327 = vsel %vm319, %v301, 0
          %v330 = vsel %vm319, %v302, 0
          %v333 = vsel %vm319, %v303, 0
          %v336 = vsel %vm319, %v304, 0
          %v339 = vsel %vm319, %v305, 0
          %v342 = vsel %vm319, %v306, 0
          %344 = vmatprep.subr.bf16.mxu0 %v292
          %345 = vmatpush1.bf16.msra.mxu0 %v291
          %346 = vmatprep.subr.bf16.mxu0 %v324
          %347 = vmatpush1.bf16.msra.mxu0 %v321
          %348 = vmatprep.subr.bf16.mxu0 0
          %349 = vmatpush1.bf16.msra.mxu0 0
          %350 = vmatprep.subr.bf16.mxu0 0
          %351 = vmatpush1.bf16.msra.mxu0 0
          %352 = vmatprep.subr.bf16.mxu0 0
          %353 = vmatpush1.bf16.msra.mxu0 0
          %354 = vmatprep.subr.bf16.mxu0 0
          %355 = vmatpush1.bf16.msra.mxu0 0
          %356 = vmatprep.subr.bf16.mxu0 0
          %357 = vmatpush1.bf16.msra.mxu0 0
          %358 = vmatprep.subr.bf16.mxu0 0
          %359 = vmatpush1.bf16.msra.mxu0 0
          %360 = vmatprep.subr.bf16.mxu0 0
          %361 = vmatpush1.bf16.msra.mxu0 0
          %362 = vmatprep.subr.bf16.mxu0 0
          %363 = vmatpush1.bf16.msra.mxu0 0
          %364 = vmatprep.subr.bf16.mxu0 0
          %365 = vmatpush1.bf16.msra.mxu0 0
          %366 = vmatprep.subr.bf16.mxu0 0
          %367 = vmatpush1.bf16.msra.mxu0 0
          %368 = vmatprep.subr.bf16.mxu0 0
          %369 = vmatpush1.bf16.msra.mxu0 0
          %370 = vmatprep.subr.bf16.mxu0 0
          %371 = vmatpush1.bf16.msra.mxu0 0
          %372 = vmatprep.subr.bf16.mxu0 0
          %373 = vmatpush1.bf16.msra.mxu0 0
          %374 = vmatprep.subr.bf16.mxu0 0
          %375 = vmatpush1.bf16.msra.mxu0 0
          %376 = vmatprep.mubr.bf16.mxu0 0
          %377 = vmatmul.mubr.bf16.gmra.mrb[0].mxu0 %v317
          %v378 = vpop.f32.mrb[0].mxu0
          %v379 = vadd.f32 0.0, %v378
          %v380 = vpop.f32.mrb[0].mxu0
          %v381 = vadd.f32 0.0, %v380
          %v382 = vpop.f32.mrb[0].mxu0
          %v383 = vpop.f32.mrb[0].mxu0
          %384 = vdwg.mxu0
          %385 = vmatprep.subr.bf16.mxu0 %v294
          %386 = vmatpush1.bf16.msra.mxu0 %v293
          %387 = vmatprep.subr.bf16.mxu0 %v330
          %388 = vmatpush1.bf16.msra.mxu0 %v327
          %389 = vmatprep.subr.bf16.mxu0 0
          %390 = vmatpush1.bf16.msra.mxu0 0
          %391 = vmatprep.subr.bf16.mxu0 0
          %392 = vmatpush1.bf16.msra.mxu0 0
          %393 = vmatprep.subr.bf16.mxu0 0
          %394 = vmatpush1.bf16.msra.mxu0 0
          %395 = vmatprep.subr.bf16.mxu0 0
          %396 = vmatpush1.bf16.msra.mxu0 0
          %397 = vmatprep.subr.bf16.mxu0 0
          %398 = vmatpush1.bf16.msra.mxu0 0
          %399 = vmatprep.subr.bf16.mxu0 0
          %400 = vmatpush1.bf16.msra.mxu0 0
          %401 = vmatprep.subr.bf16.mxu0 0
          %402 = vmatpush1.bf16.msra.mxu0 0
          %403 = vmatprep.subr.bf16.mxu0 0
          %404 = vmatpush1.bf16.msra.mxu0 0
          %405 = vmatprep.subr.bf16.mxu0 0
          %406 = vmatpush1.bf16.msra.mxu0 0
          %407 = vmatprep.subr.bf16.mxu0 0
          %408 = vmatpush1.bf16.msra.mxu0 0
          %409 = vmatprep.subr.bf16.mxu0 0
          %410 = vmatpush1.bf16.msra.mxu0 0
          %411 = vmatprep.subr.bf16.mxu0 0
          %412 = vmatpush1.bf16.msra.mxu0 0
          %413 = vmatprep.subr.bf16.mxu0 0
          %414 = vmatpush1.bf16.msra.mxu0 0
          %415 = vmatprep.subr.bf16.mxu0 0
          %416 = vmatpush1.bf16.msra.mxu0 0
          %417 = vmatprep.mubr.bf16.mxu0 0
          %418 = vmatmul.mubr.bf16.gmra.mrb[0].mxu0 %v317
          %v419 = vpop.f32.mrb[0].mxu0
          %v420 = vadd.f32 0.0, %v419
          %v421 = vpop.f32.mrb[0].mxu0
          %v422 = vadd.f32 0.0, %v421
          %v423 = vpop.f32.mrb[0].mxu0
          %v424 = vpop.f32.mrb[0].mxu0
          %425 = vdwg.mxu0
          %426 = vmatprep.subr.bf16.mxu0 %v296
          %427 = vmatpush1.bf16.msra.mxu0 %v295
          %428 = vmatprep.subr.bf16.mxu0 %v336
          %429 = vmatpush1.bf16.msra.mxu0 %v333
          %430 = vmatprep.subr.bf16.mxu0 0
          %431 = vmatpush1.bf16.msra.mxu0 0
          %432 = vmatprep.subr.bf16.mxu0 0
          %433 = vmatpush1.bf16.msra.mxu0 0
          %434 = vmatprep.subr.bf16.mxu0 0
          %435 = vmatpush1.bf16.msra.mxu0 0
          %436 = vmatprep.subr.bf16.mxu0 0
          %437 = vmatpush1.bf16.msra.mxu0 0
          %438 = vmatprep.subr.bf16.mxu0 0
          %439 = vmatpush1.bf16.msra.mxu0 0
          %440 = vmatprep.subr.bf16.mxu0 0
          %441 = vmatpush1.bf16.msra.mxu0 0
          %442 = vmatprep.subr.bf16.mxu0 0
          %443 = vmatpush1.bf16.msra.mxu0 0
          %444 = vmatprep.subr.bf16.mxu0 0
          %445 = vmatpush1.bf16.msra.mxu0 0
          %446 = vmatprep.subr.bf16.mxu0 0
          %447 = vmatpush1.bf16.msra.mxu0 0
          %448 = vmatprep.subr.bf16.mxu0 0
          %449 = vmatpush1.bf16.msra.mxu0 0
          %450 = vmatprep.subr.bf16.mxu0 0
          %451 = vmatpush1.bf16.msra.mxu0 0
          %452 = vmatprep.subr.bf16.mxu0 0
          %453 = vmatpush1.bf16.msra.mxu0 0
          %454 = vmatprep.subr.bf16.mxu0 0
          %455 = vmatpush1.bf16.msra.mxu0 0
          %456 = vmatprep.subr.bf16.mxu0 0
          %457 = vmatpush1.bf16.msra.mxu0 0
          %458 = vmatprep.mubr.bf16.mxu0 0
          %459 = vmatmul.mubr.bf16.gmra.mrb[0].mxu0 %v317
          %v460 = vpop.f32.mrb[0].mxu0
          %v461 = vadd.f32 0.0, %v460
          %v462 = vpop.f32.mrb[0].mxu0
          %v463 = vadd.f32 0.0, %v462
          %v464 = vpop.f32.mrb[0].mxu0
          %v465 = vpop.f32.mrb[0].mxu0
          %466 = vdwg.mxu0
          %467 = vmatprep.subr.bf16.mxu0 %v298
          %468 = vmatpush1.bf16.msra.mxu0 %v297
          %469 = vmatprep.subr.bf16.mxu0 %v342
          %470 = vmatpush1.bf16.msra.mxu0 %v339
          %471 = vmatprep.subr.bf16.mxu0 0
          %472 = vmatpush1.bf16.msra.mxu0 0
          %473 = vmatprep.subr.bf16.mxu0 0
          %474 = vmatpush1.bf16.msra.mxu0 0
          %475 = vmatprep.subr.bf16.mxu0 0
          %476 = vmatpush1.bf16.msra.mxu0 0
          %477 = vmatprep.subr.bf16.mxu0 0
          %478 = vmatpush1.bf16.msra.mxu0 0
          %479 = vmatprep.subr.bf16.mxu0 0
          %480 = vmatpush1.bf16.msra.mxu0 0
          %481 = vmatprep.subr.bf16.mxu0 0
          %482 = vmatpush1.bf16.msra.mxu0 0
          %483 = vmatprep.subr.bf16.mxu0 0
          %484 = vmatpush1.bf16.msra.mxu0 0
          %485 = vmatprep.subr.bf16.mxu0 0
          %486 = vmatpush1.bf16.msra.mxu0 0
          %487 = vmatprep.subr.bf16.mxu0 0
          %488 = vmatpush1.bf16.msra.mxu0 0
          %489 = vmatprep.subr.bf16.mxu0 0
          %490 = vmatpush1.bf16.msra.mxu0 0
          %491 = vmatprep.subr.bf16.mxu0 0
          %492 = vmatpush1.bf16.msra.mxu0 0
          %493 = vmatprep.subr.bf16.mxu0 0
          %494 = vmatpush1.bf16.msra.mxu0 0
          %495 = vmatprep.subr.bf16.mxu0 0
          %496 = vmatpush1.bf16.msra.mxu0 0
          %497 = vmatprep.subr.bf16.mxu0 0
          %498 = vmatpush1.bf16.msra.mxu0 0
          %499 = vmatprep.mubr.bf16.mxu0 0
          %500 = vmatmul.mubr.bf16.gmra.mrb[0].mxu0 %v317
          %v501 = vpop.f32.mrb[0].mxu0
          %v502 = vadd.f32 0.0, %v501
          %v503 = vpop.f32.mrb[0].mxu0
          %v504 = vadd.f32 0.0, %v503
          %v505 = vpop.f32.mrb[0].mxu0
          %v506 = vpop.f32.mrb[0].mxu0
          %507 = vdwg.mxu0
          %v508 = vpack.c.bf16 %v379, %v379
          %v509 = vpack.c.bf16 %v381, %v381
          %v510 = vpack.c.bf16 %v420, %v420
          %v511 = vpack.c.bf16 %v422, %v422
          %v512 = vpack.c.bf16 %v461, %v461
          %v513 = vpack.c.bf16 %v463, %v463
          %v514 = vpack.c.bf16 %v502, %v502
          %v515 = vpack.c.bf16 %v504, %v504
          %v524 = vunpack.c.l.b16 %v508
          %v525 = vunpack.c.l.b16 %v509
          %v526 = vunpack.c.l.b16 %v510
          %v527 = vunpack.c.l.b16 %v511
          %v528 = vunpack.c.l.b16 %v512
          %v529 = vunpack.c.l.b16 %v513
          %v530 = vunpack.c.l.b16 %v514
          %v531 = vunpack.c.l.b16 %v515
          %v532 = vpack.c.b16 %v525, %v524
          %v533 = vpack.c.b16 %v527, %v526
          %v534 = vpack.c.b16 %v529, %v528
          %v535 = vpack.c.b16 %v531, %v530
          %540 = vst [vmem:[#allocation2] sm:$0xff] %v532
          %541 = vst [vmem:[#allocation2 + $0x8] sm:$0xff] %v533
          %542 = vst [vmem:[#allocation2 + $0x10] sm:$0xff] %v534
          %543 = vst [vmem:[#allocation2 + $0x18] sm:$0xff] %v535
        $region48: #{tpu_custom_call.1} parent=31 // pred_fallthru
          _
        %v544 = vld [vmem:[#allocation2] sm:$0xff]
        %v545 = vld [vmem:[#allocation2 + $0x8] sm:$0xff]
        %v546 = vld [vmem:[#allocation2 + $0x10] sm:$0xff]
        %v547 = vld [vmem:[#allocation2 + $0x18] sm:$0xff]
        %v548 = vld [vmem:[%s212] sm:$0xff]
        %v549 = vld [vmem:[%s212 + $0x8] sm:$0xff]
        %v550 = vld [vmem:[%s212 + $0x10] sm:$0xff]
        %v551 = vld [vmem:[%s212 + $0x18] sm:$0xff]
        %v552 = vld [vmem:[%s212 + $0x20] sm:$0xff]
        %v553 = vld [vmem:[%s212 + $0x28] sm:$0xff]
        %v554 = vld [vmem:[%s212 + $0x30] sm:$0xff]
        %v555 = vld [vmem:[%s212 + $0x38] sm:$0xff]
        %v556 = vld [vmem:[%s212 + $0x40] sm:$0xff]
        %v557 = vld [vmem:[%s212 + $0x48] sm:$0xff]
        %v558 = vld [vmem:[%s212 + $0x50] sm:$0xff]
        %v559 = vld [vmem:[%s212 + $0x58] sm:$0xff]
        %v560 = vld [vmem:[%s212 + $0x60] sm:$0xff]
        %v561 = vld [vmem:[%s212 + $0x68] sm:$0xff]
        %v562 = vld [vmem:[%s212 + $0x70] sm:$0xff]
        %v563 = vld [vmem:[%s212 + $0x78] sm:$0xff]
        %v564 = vld [vmem:[%s212 + $0x80] sm:$0xff]
        %v565 = vld [vmem:[%s212 + $0x88] sm:$0xff]
        %v566 = vld [vmem:[%s212 + $0x90] sm:$0xff]
        %v567 = vld [vmem:[%s212 + $0x98] sm:$0xff]
        %v568 = vld [vmem:[%s212 + $0xa0] sm:$0xff]
        %v569 = vld [vmem:[%s212 + $0xa8] sm:$0xff]
        %v570 = vld [vmem:[%s212 + $0xb0] sm:$0xff]
        %v571 = vld [vmem:[%s212 + $0xb8] sm:$0xff]
        %v572 = vld [vmem:[%s212 + $0xc0] sm:$0xff]
        %v573 = vld [vmem:[%s212 + $0xc8] sm:$0xff]
        %v574 = vld [vmem:[%s212 + $0xd0] sm:$0xff]
        %v575 = vld [vmem:[%s212 + $0xd8] sm:$0xff]
        %v576 = vld [vmem:[%s212 + $0xe0] sm:$0xff]
        %v577 = vld [vmem:[%s212 + $0xe8] sm:$0xff]
        %v578 = vld [vmem:[%s212 + $0xf0] sm:$0xff]
        %v579 = vld [vmem:[%s212 + $0xf8] sm:$0xff]
        %v580 = vld [vmem:[%s212 + $0x100] sm:$0xff]
        %v581 = vld [vmem:[%s212 + $0x108] sm:$0xff]
        %v582 = vld [vmem:[%s212 + $0x110] sm:$0xff]
        %v583 = vld [vmem:[%s212 + $0x118] sm:$0xff]
        %v584 = vld [vmem:[%s212 + $0x120] sm:$0xff]
        %v585 = vld [vmem:[%s212 + $0x128] sm:$0xff]
        %v586 = vld [vmem:[%s212 + $0x130] sm:$0xff]
        %v587 = vld [vmem:[%s212 + $0x138] sm:$0xff]
        %v588 = vld [vmem:[%s212 + $0x140] sm:$0xff]
        %v589 = vld [vmem:[%s212 + $0x148] sm:$0xff]
        %v590 = vld [vmem:[%s212 + $0x150] sm:$0xff]
        %v591 = vld [vmem:[%s212 + $0x158] sm:$0xff]
        %v592 = vld [vmem:[%s212 + $0x160] sm:$0xff]
        %v593 = vld [vmem:[%s212 + $0x168] sm:$0xff]
        %v594 = vld [vmem:[%s212 + $0x170] sm:$0xff]
        %v595 = vld [vmem:[%s212 + $0x178] sm:$0xff]
        %v596 = vld [vmem:[%s212 + $0x180] sm:$0xff]
        %v597 = vld [vmem:[%s212 + $0x188] sm:$0xff]
        %v598 = vld [vmem:[%s212 + $0x190] sm:$0xff]
        %v599 = vld [vmem:[%s212 + $0x198] sm:$0xff]
        %v600 = vld [vmem:[%s212 + $0x1a0] sm:$0xff]
        %v601 = vld [vmem:[%s212 + $0x1a8] sm:$0xff]
        %v602 = vld [vmem:[%s212 + $0x1b0] sm:$0xff]
        %v603 = vld [vmem:[%s212 + $0x1b8] sm:$0xff]
        %v604 = vld [vmem:[%s212 + $0x1c0] sm:$0xff]
        %v605 = vld [vmem:[%s212 + $0x1c8] sm:$0xff]
        %v606 = vld [vmem:[%s212 + $0x1d0] sm:$0xff]
        %v607 = vld [vmem:[%s212 + $0x1d8] sm:$0xff]
        %v608 = vld [vmem:[%s212 + $0x1e0] sm:$0xff]
        %v609 = vld [vmem:[%s212 + $0x1e8] sm:$0xff]
        %v610 = vld [vmem:[%s212 + $0x1f0] sm:$0xff]
        %v611 = vld [vmem:[%s212 + $0x1f8] sm:$0xff]
        %v612 = vld [vmem:[%s212 + $0x200] sm:$0xff]
        %v613 = vld [vmem:[%s212 + $0x208] sm:$0xff]
        %v614 = vld [vmem:[%s212 + $0x210] sm:$0xff]
        %v615 = vld [vmem:[%s212 + $0x218] sm:$0xff]
        %v616 = vld [vmem:[%s212 + $0x220] sm:$0xff]
        %v617 = vld [vmem:[%s212 + $0x228] sm:$0xff]
        %v618 = vld [vmem:[%s212 + $0x230] sm:$0xff]
        %v619 = vld [vmem:[%s212 + $0x238] sm:$0xff]
        %v620 = vld [vmem:[%s212 + $0x240] sm:$0xff]
        %v621 = vld [vmem:[%s212 + $0x248] sm:$0xff]
        %v622 = vld [vmem:[%s212 + $0x250] sm:$0xff]
        %v623 = vld [vmem:[%s212 + $0x258] sm:$0xff]
        %v624 = vld [vmem:[%s212 + $0x260] sm:$0xff]
        %v625 = vld [vmem:[%s212 + $0x268] sm:$0xff]
        %v626 = vld [vmem:[%s212 + $0x270] sm:$0xff]
        %v627 = vld [vmem:[%s212 + $0x278] sm:$0xff]
        %v628 = vld [vmem:[%s212 + $0x280] sm:$0xff]
        %v629 = vld [vmem:[%s212 + $0x288] sm:$0xff]
        %v630 = vld [vmem:[%s212 + $0x290] sm:$0xff]
        %v631 = vld [vmem:[%s212 + $0x298] sm:$0xff]
        %v632 = vld [vmem:[%s212 + $0x2a0] sm:$0xff]
        %v633 = vld [vmem:[%s212 + $0x2a8] sm:$0xff]
        %v634 = vld [vmem:[%s212 + $0x2b0] sm:$0xff]
        %v635 = vld [vmem:[%s212 + $0x2b8] sm:$0xff]
        %v636 = vld [vmem:[%s212 + $0x2c0] sm:$0xff]
        %v637 = vld [vmem:[%s212 + $0x2c8] sm:$0xff]
        %v638 = vld [vmem:[%s212 + $0x2d0] sm:$0xff]
        %v639 = vld [vmem:[%s212 + $0x2d8] sm:$0xff]
        %v640 = vld [vmem:[%s212 + $0x2e0] sm:$0xff]
        %v641 = vld [vmem:[%s212 + $0x2e8] sm:$0xff]
        %v642 = vld [vmem:[%s212 + $0x2f0] sm:$0xff]
        %v643 = vld [vmem:[%s212 + $0x2f8] sm:$0xff]
        %v644 = vld [vmem:[%s212 + $0x300] sm:$0xff]
        %v645 = vld [vmem:[%s212 + $0x308] sm:$0xff]
        %v646 = vld [vmem:[%s212 + $0x310] sm:$0xff]
        %v647 = vld [vmem:[%s212 + $0x318] sm:$0xff]
        %v648 = vld [vmem:[%s212 + $0x320] sm:$0xff]
        %v649 = vld [vmem:[%s212 + $0x328] sm:$0xff]
        %v650 = vld [vmem:[%s212 + $0x330] sm:$0xff]
        %v651 = vld [vmem:[%s212 + $0x338] sm:$0xff]
        %v652 = vld [vmem:[%s212 + $0x340] sm:$0xff]
        %v653 = vld [vmem:[%s212 + $0x348] sm:$0xff]
        %v654 = vld [vmem:[%s212 + $0x350] sm:$0xff]
        %v655 = vld [vmem:[%s212 + $0x358] sm:$0xff]
        %v656 = vld [vmem:[%s212 + $0x360] sm:$0xff]
        %v657 = vld [vmem:[%s212 + $0x368] sm:$0xff]
        %v658 = vld [vmem:[%s212 + $0x370] sm:$0xff]
        %v659 = vld [vmem:[%s212 + $0x378] sm:$0xff]
        %v660 = vld [vmem:[%s212 + $0x380] sm:$0xff]
        %v661 = vld [vmem:[%s212 + $0x388] sm:$0xff]
        %v662 = vld [vmem:[%s212 + $0x390] sm:$0xff]
        %v663 = vld [vmem:[%s212 + $0x398] sm:$0xff]
        %v664 = vld [vmem:[%s212 + $0x3a0] sm:$0xff]
        %v665 = vld [vmem:[%s212 + $0x3a8] sm:$0xff]
        %v666 = vld [vmem:[%s212 + $0x3b0] sm:$0xff]
        %v667 = vld [vmem:[%s212 + $0x3b8] sm:$0xff]
        %v668 = vld [vmem:[%s212 + $0x3c0] sm:$0xff]
        %v669 = vld [vmem:[%s212 + $0x3c8] sm:$0xff]
        %v670 = vld [vmem:[%s212 + $0x3d0] sm:$0xff]
        %v671 = vld [vmem:[%s212 + $0x3d8] sm:$0xff]
        %v672 = vld [vmem:[%s212 + $0x3e0] sm:$0xff]
        %v673 = vld [vmem:[%s212 + $0x3e8] sm:$0xff]
        %v674 = vld [vmem:[%s212 + $0x3f0] sm:$0xff]
        %v675 = vld [vmem:[%s212 + $0x3f8] sm:$0xff]
        %v676 = vld [vmem:[%s212 + $0x400] sm:$0xff]
        %v677 = vld [vmem:[%s212 + $0x408] sm:$0xff]
        %v678 = vld [vmem:[%s212 + $0x410] sm:$0xff]
        %v679 = vld [vmem:[%s212 + $0x418] sm:$0xff]
        %v680 = vld [vmem:[%s212 + $0x420] sm:$0xff]
        %v681 = vld [vmem:[%s212 + $0x428] sm:$0xff]
        %v682 = vld [vmem:[%s212 + $0x430] sm:$0xff]
        %v683 = vld [vmem:[%s212 + $0x438] sm:$0xff]
        %v684 = vld [vmem:[%s212 + $0x440] sm:$0xff]
        %v685 = vld [vmem:[%s212 + $0x448] sm:$0xff]
        %v686 = vld [vmem:[%s212 + $0x450] sm:$0xff]
        %v687 = vld [vmem:[%s212 + $0x458] sm:$0xff]
        %v688 = vld [vmem:[%s212 + $0x460] sm:$0xff]
        %v689 = vld [vmem:[%s212 + $0x468] sm:$0xff]
        %v690 = vld [vmem:[%s212 + $0x470] sm:$0xff]
        %v691 = vld [vmem:[%s212 + $0x478] sm:$0xff]
        %v692 = vld [vmem:[%s212 + $0x480] sm:$0xff]
        %v693 = vld [vmem:[%s212 + $0x488] sm:$0xff]
        %v694 = vld [vmem:[%s212 + $0x490] sm:$0xff]
        %v695 = vld [vmem:[%s212 + $0x498] sm:$0xff]
        %v696 = vld [vmem:[%s212 + $0x4a0] sm:$0xff]
        %v697 = vld [vmem:[%s212 + $0x4a8] sm:$0xff]
        %v698 = vld [vmem:[%s212 + $0x4b0] sm:$0xff]
        %v699 = vld [vmem:[%s212 + $0x4b8] sm:$0xff]
        %v700 = vld [vmem:[%s212 + $0x4c0] sm:$0xff]
        %v701 = vld [vmem:[%s212 + $0x4c8] sm:$0xff]
        %v702 = vld [vmem:[%s212 + $0x4d0] sm:$0xff]
        %v703 = vld [vmem:[%s212 + $0x4d8] sm:$0xff]
        %v704 = vld [vmem:[%s212 + $0x4e0] sm:$0xff]
        %v705 = vld [vmem:[%s212 + $0x4e8] sm:$0xff]
        %v706 = vld [vmem:[%s212 + $0x4f0] sm:$0xff]
        %v707 = vld [vmem:[%s212 + $0x4f8] sm:$0xff]
        %v708 = vld [vmem:[%s212 + $0x500] sm:$0xff]
        %v709 = vld [vmem:[%s212 + $0x508] sm:$0xff]
        %v710 = vld [vmem:[%s212 + $0x510] sm:$0xff]
        %v711 = vld [vmem:[%s212 + $0x518] sm:$0xff]
        %v712 = vld [vmem:[%s212 + $0x520] sm:$0xff]
        %v713 = vld [vmem:[%s212 + $0x528] sm:$0xff]
        %v714 = vld [vmem:[%s212 + $0x530] sm:$0xff]
        %v715 = vld [vmem:[%s212 + $0x538] sm:$0xff]
        %v716 = vld [vmem:[%s212 + $0x540] sm:$0xff]
        %v717 = vld [vmem:[%s212 + $0x548] sm:$0xff]
        %v718 = vld [vmem:[%s212 + $0x550] sm:$0xff]
        %v719 = vld [vmem:[%s212 + $0x558] sm:$0xff]
        %v720 = vld [vmem:[%s212 + $0x560] sm:$0xff]
        %v721 = vld [vmem:[%s212 + $0x568] sm:$0xff]
        %v722 = vld [vmem:[%s212 + $0x570] sm:$0xff]
        %v723 = vld [vmem:[%s212 + $0x578] sm:$0xff]
        %v724 = vld [vmem:[%s212 + $0x580] sm:$0xff]
        %v725 = vld [vmem:[%s212 + $0x588] sm:$0xff]
        %v726 = vld [vmem:[%s212 + $0x590] sm:$0xff]
        %v727 = vld [vmem:[%s212 + $0x598] sm:$0xff]
        %v728 = vld [vmem:[%s212 + $0x5a0] sm:$0xff]
        %v729 = vld [vmem:[%s212 + $0x5a8] sm:$0xff]
        %v730 = vld [vmem:[%s212 + $0x5b0] sm:$0xff]
        %v731 = vld [vmem:[%s212 + $0x5b8] sm:$0xff]
        %v732 = vld [vmem:[%s212 + $0x5c0] sm:$0xff]
        %v733 = vld [vmem:[%s212 + $0x5c8] sm:$0xff]
        %v734 = vld [vmem:[%s212 + $0x5d0] sm:$0xff]
        %v735 = vld [vmem:[%s212 + $0x5d8] sm:$0xff]
        %v736 = vld [vmem:[%s212 + $0x5e0] sm:$0xff]
        %v737 = vld [vmem:[%s212 + $0x5e8] sm:$0xff]
        %v738 = vld [vmem:[%s212 + $0x5f0] sm:$0xff]
        %v739 = vld [vmem:[%s212 + $0x5f8] sm:$0xff]
        %v740 = vld [vmem:[%s212 + $0x600] sm:$0xff]
        %v741 = vld [vmem:[%s212 + $0x608] sm:$0xff]
        %v742 = vld [vmem:[%s212 + $0x610] sm:$0xff]
        %v743 = vld [vmem:[%s212 + $0x618] sm:$0xff]
        %v744 = vld [vmem:[%s212 + $0x620] sm:$0xff]
        %v745 = vld [vmem:[%s212 + $0x628] sm:$0xff]
        %v746 = vld [vmem:[%s212 + $0x630] sm:$0xff]
        %v747 = vld [vmem:[%s212 + $0x638] sm:$0xff]
        %v748 = vld [vmem:[%s212 + $0x640] sm:$0xff]
        %v749 = vld [vmem:[%s212 + $0x648] sm:$0xff]
        %v750 = vld [vmem:[%s212 + $0x650] sm:$0xff]
        %v751 = vld [vmem:[%s212 + $0x658] sm:$0xff]
        %v752 = vld [vmem:[%s212 + $0x660] sm:$0xff]
        %v753 = vld [vmem:[%s212 + $0x668] sm:$0xff]
        %v754 = vld [vmem:[%s212 + $0x670] sm:$0xff]
        %v755 = vld [vmem:[%s212 + $0x678] sm:$0xff]
        %v756 = vld [vmem:[%s212 + $0x680] sm:$0xff]
        %v757 = vld [vmem:[%s212 + $0x688] sm:$0xff]
        %v758 = vld [vmem:[%s212 + $0x690] sm:$0xff]
        %v759 = vld [vmem:[%s212 + $0x698] sm:$0xff]
        %v760 = vld [vmem:[%s212 + $0x6a0] sm:$0xff]
        %v761 = vld [vmem:[%s212 + $0x6a8] sm:$0xff]
        %v762 = vld [vmem:[%s212 + $0x6b0] sm:$0xff]
        %v763 = vld [vmem:[%s212 + $0x6b8] sm:$0xff]
        %v764 = vld [vmem:[%s212 + $0x6c0] sm:$0xff]
        %v765 = vld [vmem:[%s212 + $0x6c8] sm:$0xff]
        %v766 = vld [vmem:[%s212 + $0x6d0] sm:$0xff]
        %v767 = vld [vmem:[%s212 + $0x6d8] sm:$0xff]
        %v768 = vld [vmem:[%s212 + $0x6e0] sm:$0xff]
        %v769 = vld [vmem:[%s212 + $0x6e8] sm:$0xff]
        %v770 = vld [vmem:[%s212 + $0x6f0] sm:$0xff]
        %v771 = vld [vmem:[%s212 + $0x6f8] sm:$0xff]
        %v772 = vld [vmem:[%s212 + $0x700] sm:$0xff]
        %v773 = vld [vmem:[%s212 + $0x708] sm:$0xff]
        %v774 = vld [vmem:[%s212 + $0x710] sm:$0xff]
        %v775 = vld [vmem:[%s212 + $0x718] sm:$0xff]
        %v776 = vld [vmem:[%s212 + $0x720] sm:$0xff]
        %v777 = vld [vmem:[%s212 + $0x728] sm:$0xff]
        %v778 = vld [vmem:[%s212 + $0x730] sm:$0xff]
        %v779 = vld [vmem:[%s212 + $0x738] sm:$0xff]
        %v780 = vld [vmem:[%s212 + $0x740] sm:$0xff]
        %v781 = vld [vmem:[%s212 + $0x748] sm:$0xff]
        %v782 = vld [vmem:[%s212 + $0x750] sm:$0xff]
        %v783 = vld [vmem:[%s212 + $0x758] sm:$0xff]
        %v784 = vld [vmem:[%s212 + $0x760] sm:$0xff]
        %v785 = vld [vmem:[%s212 + $0x768] sm:$0xff]
        %v786 = vld [vmem:[%s212 + $0x770] sm:$0xff]
        %v787 = vld [vmem:[%s212 + $0x778] sm:$0xff]
        %v788 = vld [vmem:[%s212 + $0x780] sm:$0xff]
        %v789 = vld [vmem:[%s212 + $0x788] sm:$0xff]
        %v790 = vld [vmem:[%s212 + $0x790] sm:$0xff]
        %v791 = vld [vmem:[%s212 + $0x798] sm:$0xff]
        %v792 = vld [vmem:[%s212 + $0x7a0] sm:$0xff]
        %v793 = vld [vmem:[%s212 + $0x7a8] sm:$0xff]
        %v794 = vld [vmem:[%s212 + $0x7b0] sm:$0xff]
        %v795 = vld [vmem:[%s212 + $0x7b8] sm:$0xff]
        %v796 = vld [vmem:[%s212 + $0x7c0] sm:$0xff]
        %v797 = vld [vmem:[%s212 + $0x7c8] sm:$0xff]
        %v798 = vld [vmem:[%s212 + $0x7d0] sm:$0xff]
        %v799 = vld [vmem:[%s212 + $0x7d8] sm:$0xff]
        %v800 = vld [vmem:[%s212 + $0x7e0] sm:$0xff]
        %v801 = vld [vmem:[%s212 + $0x7e8] sm:$0xff]
        %v802 = vld [vmem:[%s212 + $0x7f0] sm:$0xff]
        %v803 = vld [vmem:[%s212 + $0x7f8] sm:$0xff]
        %v808 = vunpack.c.l.b16 %v544
        %v809 = vunpack.c.h.b16 %v544
        %v810 = vunpack.c.l.b16 %v545
        %v811 = vunpack.c.h.b16 %v545
        %v812 = vunpack.c.l.b16 %v546
        %v813 = vunpack.c.h.b16 %v546
        %v814 = vunpack.c.l.b16 %v547
        %v815 = vunpack.c.h.b16 %v547
        %v816 = vpack.c.b16 %v808, %v808
        %v817 = vpack.c.b16 %v809, %v809
        %v818 = vpack.c.b16 %v810, %v810
        %v819 = vpack.c.b16 %v811, %v811
        %v820 = vpack.c.b16 %v812, %v812
        %v821 = vpack.c.b16 %v813, %v813
        %v822 = vpack.c.b16 %v814, %v814
        %v823 = vpack.c.b16 %v815, %v815
        %v1088 = vunpack.c.l.b16 %v548
        %v1089 = vunpack.c.h.b16 %v548
        %v1090 = vunpack.c.l.b16 %v549
        %v1091 = vunpack.c.h.b16 %v549
        %v1092 = vunpack.c.l.b16 %v550
        %v1093 = vunpack.c.h.b16 %v550
        %v1094 = vunpack.c.l.b16 %v551
        %v1095 = vunpack.c.h.b16 %v551
        %v1096 = vunpack.c.l.b16 %v552
        %v1097 = vunpack.c.h.b16 %v552
        %v1098 = vunpack.c.l.b16 %v553
        %v1099 = vunpack.c.h.b16 %v553
        %v1100 = vunpack.c.l.b16 %v554
        %v1101 = vunpack.c.h.b16 %v554
        %v1102 = vunpack.c.l.b16 %v555
        %v1103 = vunpack.c.h.b16 %v555
        %v1104 = vunpack.c.l.b16 %v556
        %v1105 = vunpack.c.h.b16 %v556
        %v1106 = vunpack.c.l.b16 %v557
        %v1107 = vunpack.c.h.b16 %v557
        %v1108 = vunpack.c.l.b16 %v558
        %v1109 = vunpack.c.h.b16 %v558
        %v1110 = vunpack.c.l.b16 %v559
        %v1111 = vunpack.c.h.b16 %v559
        %v1112 = vunpack.c.l.b16 %v560
        %v1113 = vunpack.c.h.b16 %v560
        %v1114 = vunpack.c.l.b16 %v561
        %v1115 = vunpack.c.h.b16 %v561
        %v1116 = vunpack.c.l.b16 %v562
        %v1117 = vunpack.c.h.b16 %v562
        %v1118 = vunpack.c.l.b16 %v563
        %v1119 = vunpack.c.h.b16 %v563
        %v1120 = vunpack.c.l.b16 %v564
        %v1121 = vunpack.c.h.b16 %v564
        %v1122 = vunpack.c.l.b16 %v565
        %v1123 = vunpack.c.h.b16 %v565
        %v1124 = vunpack.c.l.b16 %v566
        %v1125 = vunpack.c.h.b16 %v566
        %v1126 = vunpack.c.l.b16 %v567
        %v1127 = vunpack.c.h.b16 %v567
        %v1128 = vunpack.c.l.b16 %v568
        %v1129 = vunpack.c.h.b16 %v568
        %v1130 = vunpack.c.l.b16 %v569
        %v1131 = vunpack.c.h.b16 %v569
        %v1132 = vunpack.c.l.b16 %v570
        %v1133 = vunpack.c.h.b16 %v570
        %v1134 = vunpack.c.l.b16 %v571
        %v1135 = vunpack.c.h.b16 %v571
        %v1136 = vunpack.c.l.b16 %v572
        %v1137 = vunpack.c.h.b16 %v572
        %v1138 = vunpack.c.l.b16 %v573
        %v1139 = vunpack.c.h.b16 %v573
        %v1140 = vunpack.c.l.b16 %v574
        %v1141 = vunpack.c.h.b16 %v574
        %v1142 = vunpack.c.l.b16 %v575
        %v1143 = vunpack.c.h.b16 %v575
        %v1144 = vunpack.c.l.b16 %v576
        %v1145 = vunpack.c.h.b16 %v576
        %v1146 = vunpack.c.l.b16 %v577
        %v1147 = vunpack.c.h.b16 %v577
        %v1148 = vunpack.c.l.b16 %v578
        %v1149 = vunpack.c.h.b16 %v578
        %v1150 = vunpack.c.l.b16 %v579
        %v1151 = vunpack.c.h.b16 %v579
        %v1152 = vunpack.c.l.b16 %v580
        %v1153 = vunpack.c.h.b16 %v580
        %v1154 = vunpack.c.l.b16 %v581
        %v1155 = vunpack.c.h.b16 %v581
        %v1156 = vunpack.c.l.b16 %v582
        %v1157 = vunpack.c.h.b16 %v582
        %v1158 = vunpack.c.l.b16 %v583
        %v1159 = vunpack.c.h.b16 %v583
        %v1160 = vunpack.c.l.b16 %v584
        %v1161 = vunpack.c.h.b16 %v584
        %v1162 = vunpack.c.l.b16 %v585
        %v1163 = vunpack.c.h.b16 %v585
        %v1164 = vunpack.c.l.b16 %v586
        %v1165 = vunpack.c.h.b16 %v586
        %v1166 = vunpack.c.l.b16 %v587
        %v1167 = vunpack.c.h.b16 %v587
        %v1168 = vunpack.c.l.b16 %v588
        %v1169 = vunpack.c.h.b16 %v588
        %v1170 = vunpack.c.l.b16 %v589
        %v1171 = vunpack.c.h.b16 %v589
        %v1172 = vunpack.c.l.b16 %v590
        %v1173 = vunpack.c.h.b16 %v590
        %v1174 = vunpack.c.l.b16 %v591
        %v1175 = vunpack.c.h.b16 %v591
        %v1176 = vunpack.c.l.b16 %v592
        %v1177 = vunpack.c.h.b16 %v592
        %v1178 = vunpack.c.l.b16 %v593
        %v1179 = vunpack.c.h.b16 %v593
        %v1180 = vunpack.c.l.b16 %v594
        %v1181 = vunpack.c.h.b16 %v594
        %v1182 = vunpack.c.l.b16 %v595
        %v1183 = vunpack.c.h.b16 %v595
        %v1184 = vunpack.c.l.b16 %v596
        %v1185 = vunpack.c.h.b16 %v596
        %v1186 = vunpack.c.l.b16 %v597
        %v1187 = vunpack.c.h.b16 %v597
        %v1188 = vunpack.c.l.b16 %v598
        %v1189 = vunpack.c.h.b16 %v598
        %v1190 = vunpack.c.l.b16 %v599
        %v1191 = vunpack.c.h.b16 %v599
        %v1192 = vunpack.c.l.b16 %v600
        %v1193 = vunpack.c.h.b16 %v600
        %v1194 = vunpack.c.l.b16 %v601
        %v1195 = vunpack.c.h.b16 %v601
        %v1196 = vunpack.c.l.b16 %v602
        %v1197 = vunpack.c.h.b16 %v602
        %v1198 = vunpack.c.l.b16 %v603
        %v1199 = vunpack.c.h.b16 %v603
        %v1200 = vunpack.c.l.b16 %v604
        %v1201 = vunpack.c.h.b16 %v604
        %v1202 = vunpack.c.l.b16 %v605
        %v1203 = vunpack.c.h.b16 %v605
        %v1204 = vunpack.c.l.b16 %v606
        %v1205 = vunpack.c.h.b16 %v606
        %v1206 = vunpack.c.l.b16 %v607
        %v1207 = vunpack.c.h.b16 %v607
        %v1208 = vunpack.c.l.b16 %v608
        %v1209 = vunpack.c.h.b16 %v608
        %v1210 = vunpack.c.l.b16 %v609
        %v1211 = vunpack.c.h.b16 %v609
        %v1212 = vunpack.c.l.b16 %v610
        %v1213 = vunpack.c.h.b16 %v610
        %v1214 = vunpack.c.l.b16 %v611
        %v1215 = vunpack.c.h.b16 %v611
        %v1216 = vunpack.c.l.b16 %v612
        %v1217 = vunpack.c.h.b16 %v612
        %v1218 = vunpack.c.l.b16 %v613
        %v1219 = vunpack.c.h.b16 %v613
        %v1220 = vunpack.c.l.b16 %v614
        %v1221 = vunpack.c.h.b16 %v614
        %v1222 = vunpack.c.l.b16 %v615
        %v1223 = vunpack.c.h.b16 %v615
        %v1224 = vunpack.c.l.b16 %v616
        %v1225 = vunpack.c.h.b16 %v616
        %v1226 = vunpack.c.l.b16 %v617
        %v1227 = vunpack.c.h.b16 %v617
        %v1228 = vunpack.c.l.b16 %v618
        %v1229 = vunpack.c.h.b16 %v618
        %v1230 = vunpack.c.l.b16 %v619
        %v1231 = vunpack.c.h.b16 %v619
        %v1232 = vunpack.c.l.b16 %v620
        %v1233 = vunpack.c.h.b16 %v620
        %v1234 = vunpack.c.l.b16 %v621
        %v1235 = vunpack.c.h.b16 %v621
        %v1236 = vunpack.c.l.b16 %v622
        %v1237 = vunpack.c.h.b16 %v622
        %v1238 = vunpack.c.l.b16 %v623
        %v1239 = vunpack.c.h.b16 %v623
        %v1240 = vunpack.c.l.b16 %v624
        %v1241 = vunpack.c.h.b16 %v624
        %v1242 = vunpack.c.l.b16 %v625
        %v1243 = vunpack.c.h.b16 %v625
        %v1244 = vunpack.c.l.b16 %v626
        %v1245 = vunpack.c.h.b16 %v626
        %v1246 = vunpack.c.l.b16 %v627
        %v1247 = vunpack.c.h.b16 %v627
        %v1248 = vunpack.c.l.b16 %v628
        %v1249 = vunpack.c.h.b16 %v628
        %v1250 = vunpack.c.l.b16 %v629
        %v1251 = vunpack.c.h.b16 %v629
        %v1252 = vunpack.c.l.b16 %v630
        %v1253 = vunpack.c.h.b16 %v630
        %v1254 = vunpack.c.l.b16 %v631
        %v1255 = vunpack.c.h.b16 %v631
        %v1256 = vunpack.c.l.b16 %v632
        %v1257 = vunpack.c.h.b16 %v632
        %v1258 = vunpack.c.l.b16 %v633
        %v1259 = vunpack.c.h.b16 %v633
        %v1260 = vunpack.c.l.b16 %v634
        %v1261 = vunpack.c.h.b16 %v634
        %v1262 = vunpack.c.l.b16 %v635
        %v1263 = vunpack.c.h.b16 %v635
        %v1264 = vunpack.c.l.b16 %v636
        %v1265 = vunpack.c.h.b16 %v636
        %v1266 = vunpack.c.l.b16 %v637
        %v1267 = vunpack.c.h.b16 %v637
        %v1268 = vunpack.c.l.b16 %v638
        %v1269 = vunpack.c.h.b16 %v638
        %v1270 = vunpack.c.l.b16 %v639
        %v1271 = vunpack.c.h.b16 %v639
        %v1272 = vunpack.c.l.b16 %v640
        %v1273 = vunpack.c.h.b16 %v640
        %v1274 = vunpack.c.l.b16 %v641
        %v1275 = vunpack.c.h.b16 %v641
        %v1276 = vunpack.c.l.b16 %v642
        %v1277 = vunpack.c.h.b16 %v642
        %v1278 = vunpack.c.l.b16 %v643
        %v1279 = vunpack.c.h.b16 %v643
        %v1280 = vunpack.c.l.b16 %v644
        %v1281 = vunpack.c.h.b16 %v644
        %v1282 = vunpack.c.l.b16 %v645
        %v1283 = vunpack.c.h.b16 %v645
        %v1284 = vunpack.c.l.b16 %v646
        %v1285 = vunpack.c.h.b16 %v646
        %v1286 = vunpack.c.l.b16 %v647
        %v1287 = vunpack.c.h.b16 %v647
        %v1288 = vunpack.c.l.b16 %v648
        %v1289 = vunpack.c.h.b16 %v648
        %v1290 = vunpack.c.l.b16 %v649
        %v1291 = vunpack.c.h.b16 %v649
        %v1292 = vunpack.c.l.b16 %v650
        %v1293 = vunpack.c.h.b16 %v650
        %v1294 = vunpack.c.l.b16 %v651
        %v1295 = vunpack.c.h.b16 %v651
        %v1296 = vunpack.c.l.b16 %v652
        %v1297 = vunpack.c.h.b16 %v652
        %v1298 = vunpack.c.l.b16 %v653
        %v1299 = vunpack.c.h.b16 %v653
        %v1300 = vunpack.c.l.b16 %v654
        %v1301 = vunpack.c.h.b16 %v654
        %v1302 = vunpack.c.l.b16 %v655
        %v1303 = vunpack.c.h.b16 %v655
        %v1304 = vunpack.c.l.b16 %v656
        %v1305 = vunpack.c.h.b16 %v656
        %v1306 = vunpack.c.l.b16 %v657
        %v1307 = vunpack.c.h.b16 %v657
        %v1308 = vunpack.c.l.b16 %v658
        %v1309 = vunpack.c.h.b16 %v658
        %v1310 = vunpack.c.l.b16 %v659
        %v1311 = vunpack.c.h.b16 %v659
        %v1312 = vunpack.c.l.b16 %v660
        %v1313 = vunpack.c.h.b16 %v660
        %v1314 = vunpack.c.l.b16 %v661
        %v1315 = vunpack.c.h.b16 %v661
        %v1316 = vunpack.c.l.b16 %v662
        %v1317 = vunpack.c.h.b16 %v662
        %v1318 = vunpack.c.l.b16 %v663
        %v1319 = vunpack.c.h.b16 %v663
        %v1320 = vunpack.c.l.b16 %v664
        %v1321 = vunpack.c.h.b16 %v664
        %v1322 = vunpack.c.l.b16 %v665
        %v1323 = vunpack.c.h.b16 %v665
        %v1324 = vunpack.c.l.b16 %v666
        %v1325 = vunpack.c.h.b16 %v666
        %v1326 = vunpack.c.l.b16 %v667
        %v1327 = vunpack.c.h.b16 %v667
        %v1328 = vunpack.c.l.b16 %v668
        %v1329 = vunpack.c.h.b16 %v668
        %v1330 = vunpack.c.l.b16 %v669
        %v1331 = vunpack.c.h.b16 %v669
        %v1332 = vunpack.c.l.b16 %v670
        %v1333 = vunpack.c.h.b16 %v670
        %v1334 = vunpack.c.l.b16 %v671
        %v1335 = vunpack.c.h.b16 %v671
        %v1336 = vunpack.c.l.b16 %v672
        %v1337 = vunpack.c.h.b16 %v672
        %v1338 = vunpack.c.l.b16 %v673
        %v1339 = vunpack.c.h.b16 %v673
        %v1340 = vunpack.c.l.b16 %v674
        %v1341 = vunpack.c.h.b16 %v674
        %v1342 = vunpack.c.l.b16 %v675
        %v1343 = vunpack.c.h.b16 %v675
        %v1344 = vunpack.c.l.b16 %v676
        %v1345 = vunpack.c.h.b16 %v676
        %v1346 = vunpack.c.l.b16 %v677
        %v1347 = vunpack.c.h.b16 %v677
        %v1348 = vunpack.c.l.b16 %v678
        %v1349 = vunpack.c.h.b16 %v678
        %v1350 = vunpack.c.l.b16 %v679
        %v1351 = vunpack.c.h.b16 %v679
        %v1352 = vunpack.c.l.b16 %v680
        %v1353 = vunpack.c.h.b16 %v680
        %v1354 = vunpack.c.l.b16 %v681
        %v1355 = vunpack.c.h.b16 %v681
        %v1356 = vunpack.c.l.b16 %v682
        %v1357 = vunpack.c.h.b16 %v682
        %v1358 = vunpack.c.l.b16 %v683
        %v1359 = vunpack.c.h.b16 %v683
        %v1360 = vunpack.c.l.b16 %v684
        %v1361 = vunpack.c.h.b16 %v684
        %v1362 = vunpack.c.l.b16 %v685
        %v1363 = vunpack.c.h.b16 %v685
        %v1364 = vunpack.c.l.b16 %v686
        %v1365 = vunpack.c.h.b16 %v686
        %v1366 = vunpack.c.l.b16 %v687
        %v1367 = vunpack.c.h.b16 %v687
        %v1368 = vunpack.c.l.b16 %v688
        %v1369 = vunpack.c.h.b16 %v688
        %v1370 = vunpack.c.l.b16 %v689
        %v1371 = vunpack.c.h.b16 %v689
        %v1372 = vunpack.c.l.b16 %v690
        %v1373 = vunpack.c.h.b16 %v690
        %v1374 = vunpack.c.l.b16 %v691
        %v1375 = vunpack.c.h.b16 %v691
        %v1376 = vunpack.c.l.b16 %v692
        %v1377 = vunpack.c.h.b16 %v692
        %v1378 = vunpack.c.l.b16 %v693
        %v1379 = vunpack.c.h.b16 %v693
        %v1380 = vunpack.c.l.b16 %v694
        %v1381 = vunpack.c.h.b16 %v694
        %v1382 = vunpack.c.l.b16 %v695
        %v1383 = vunpack.c.h.b16 %v695
        %v1384 = vunpack.c.l.b16 %v696
        %v1385 = vunpack.c.h.b16 %v696
        %v1386 = vunpack.c.l.b16 %v697
        %v1387 = vunpack.c.h.b16 %v697
        %v1388 = vunpack.c.l.b16 %v698
        %v1389 = vunpack.c.h.b16 %v698
        %v1390 = vunpack.c.l.b16 %v699
        %v1391 = vunpack.c.h.b16 %v699
        %v1392 = vunpack.c.l.b16 %v700
        %v1393 = vunpack.c.h.b16 %v700
        %v1394 = vunpack.c.l.b16 %v701
        %v1395 = vunpack.c.h.b16 %v701
        %v1396 = vunpack.c.l.b16 %v702
        %v1397 = vunpack.c.h.b16 %v702
        %v1398 = vunpack.c.l.b16 %v703
        %v1399 = vunpack.c.h.b16 %v703
        %v1400 = vunpack.c.l.b16 %v704
        %v1401 = vunpack.c.h.b16 %v704
        %v1402 = vunpack.c.l.b16 %v705
        %v1403 = vunpack.c.h.b16 %v705
        %v1404 = vunpack.c.l.b16 %v706
        %v1405 = vunpack.c.h.b16 %v706
        %v1406 = vunpack.c.l.b16 %v707
        %v1407 = vunpack.c.h.b16 %v707
        %v1408 = vunpack.c.l.b16 %v708
        %v1409 = vunpack.c.h.b16 %v708
        %v1410 = vunpack.c.l.b16 %v709
        %v1411 = vunpack.c.h.b16 %v709
        %v1412 = vunpack.c.l.b16 %v710
        %v1413 = vunpack.c.h.b16 %v710
        %v1414 = vunpack.c.l.b16 %v711
        %v1415 = vunpack.c.h.b16 %v711
        %v1416 = vunpack.c.l.b16 %v712
        %v1417 = vunpack.c.h.b16 %v712
        %v1418 = vunpack.c.l.b16 %v713
        %v1419 = vunpack.c.h.b16 %v713
        %v1420 = vunpack.c.l.b16 %v714
        %v1421 = vunpack.c.h.b16 %v714
        %v1422 = vunpack.c.l.b16 %v715
        %v1423 = vunpack.c.h.b16 %v715
        %v1424 = vunpack.c.l.b16 %v716
        %v1425 = vunpack.c.h.b16 %v716
        %v1426 = vunpack.c.l.b16 %v717
        %v1427 = vunpack.c.h.b16 %v717
        %v1428 = vunpack.c.l.b16 %v718
        %v1429 = vunpack.c.h.b16 %v718
        %v1430 = vunpack.c.l.b16 %v719
        %v1431 = vunpack.c.h.b16 %v719
        %v1432 = vunpack.c.l.b16 %v720
        %v1433 = vunpack.c.h.b16 %v720
        %v1434 = vunpack.c.l.b16 %v721
        %v1435 = vunpack.c.h.b16 %v721
        %v1436 = vunpack.c.l.b16 %v722
        %v1437 = vunpack.c.h.b16 %v722
        %v1438 = vunpack.c.l.b16 %v723
        %v1439 = vunpack.c.h.b16 %v723
        %v1440 = vunpack.c.l.b16 %v724
        %v1441 = vunpack.c.h.b16 %v724
        %v1442 = vunpack.c.l.b16 %v725
        %v1443 = vunpack.c.h.b16 %v725
        %v1444 = vunpack.c.l.b16 %v726
        %v1445 = vunpack.c.h.b16 %v726
        %v1446 = vunpack.c.l.b16 %v727
        %v1447 = vunpack.c.h.b16 %v727
        %v1448 = vunpack.c.l.b16 %v728
        %v1449 = vunpack.c.h.b16 %v728
        %v1450 = vunpack.c.l.b16 %v729
        %v1451 = vunpack.c.h.b16 %v729
        %v1452 = vunpack.c.l.b16 %v730
        %v1453 = vunpack.c.h.b16 %v730
        %v1454 = vunpack.c.l.b16 %v731
        %v1455 = vunpack.c.h.b16 %v731
        %v1456 = vunpack.c.l.b16 %v732
        %v1457 = vunpack.c.h.b16 %v732
        %v1458 = vunpack.c.l.b16 %v733
        %v1459 = vunpack.c.h.b16 %v733
        %v1460 = vunpack.c.l.b16 %v734
        %v1461 = vunpack.c.h.b16 %v734
        %v1462 = vunpack.c.l.b16 %v735
        %v1463 = vunpack.c.h.b16 %v735
        %v1464 = vunpack.c.l.b16 %v736
        %v1465 = vunpack.c.h.b16 %v736
        %v1466 = vunpack.c.l.b16 %v737
        %v1467 = vunpack.c.h.b16 %v737
        %v1468 = vunpack.c.l.b16 %v738
        %v1469 = vunpack.c.h.b16 %v738
        %v1470 = vunpack.c.l.b16 %v739
        %v1471 = vunpack.c.h.b16 %v739
        %v1472 = vunpack.c.l.b16 %v740
        %v1473 = vunpack.c.h.b16 %v740
        %v1474 = vunpack.c.l.b16 %v741
        %v1475 = vunpack.c.h.b16 %v741
        %v1476 = vunpack.c.l.b16 %v742
        %v1477 = vunpack.c.h.b16 %v742
        %v1478 = vunpack.c.l.b16 %v743
        %v1479 = vunpack.c.h.b16 %v743
        %v1480 = vunpack.c.l.b16 %v744
        %v1481 = vunpack.c.h.b16 %v744
        %v1482 = vunpack.c.l.b16 %v745
        %v1483 = vunpack.c.h.b16 %v745
        %v1484 = vunpack.c.l.b16 %v746
        %v1485 = vunpack.c.h.b16 %v746
        %v1486 = vunpack.c.l.b16 %v747
        %v1487 = vunpack.c.h.b16 %v747
        %v1488 = vunpack.c.l.b16 %v748
        %v1489 = vunpack.c.h.b16 %v748
        %v1490 = vunpack.c.l.b16 %v749
        %v1491 = vunpack.c.h.b16 %v749
        %v1492 = vunpack.c.l.b16 %v750
        %v1493 = vunpack.c.h.b16 %v750
        %v1494 = vunpack.c.l.b16 %v751
        %v1495 = vunpack.c.h.b16 %v751
        %v1496 = vunpack.c.l.b16 %v752
        %v1497 = vunpack.c.h.b16 %v752
        %v1498 = vunpack.c.l.b16 %v753
        %v1499 = vunpack.c.h.b16 %v753
        %v1500 = vunpack.c.l.b16 %v754
        %v1501 = vunpack.c.h.b16 %v754
        %v1502 = vunpack.c.l.b16 %v755
        %v1503 = vunpack.c.h.b16 %v755
        %v1504 = vunpack.c.l.b16 %v756
        %v1505 = vunpack.c.h.b16 %v756
        %v1506 = vunpack.c.l.b16 %v757
        %v1507 = vunpack.c.h.b16 %v757
        %v1508 = vunpack.c.l.b16 %v758
        %v1509 = vunpack.c.h.b16 %v758
        %v1510 = vunpack.c.l.b16 %v759
        %v1511 = vunpack.c.h.b16 %v759
        %v1512 = vunpack.c.l.b16 %v760
        %v1513 = vunpack.c.h.b16 %v760
        %v1514 = vunpack.c.l.b16 %v761
        %v1515 = vunpack.c.h.b16 %v761
        %v1516 = vunpack.c.l.b16 %v762
        %v1517 = vunpack.c.h.b16 %v762
        %v1518 = vunpack.c.l.b16 %v763
        %v1519 = vunpack.c.h.b16 %v763
        %v1520 = vunpack.c.l.b16 %v764
        %v1521 = vunpack.c.h.b16 %v764
        %v1522 = vunpack.c.l.b16 %v765
        %v1523 = vunpack.c.h.b16 %v765
        %v1524 = vunpack.c.l.b16 %v766
        %v1525 = vunpack.c.h.b16 %v766
        %v1526 = vunpack.c.l.b16 %v767
        %v1527 = vunpack.c.h.b16 %v767
        %v1528 = vunpack.c.l.b16 %v768
        %v1529 = vunpack.c.h.b16 %v768
        %v1530 = vunpack.c.l.b16 %v769
        %v1531 = vunpack.c.h.b16 %v769
        %v1532 = vunpack.c.l.b16 %v770
        %v1533 = vunpack.c.h.b16 %v770
        %v1534 = vunpack.c.l.b16 %v771
        %v1535 = vunpack.c.h.b16 %v771
        %v1536 = vunpack.c.l.b16 %v772
        %v1537 = vunpack.c.h.b16 %v772
        %v1538 = vunpack.c.l.b16 %v773
        %v1539 = vunpack.c.h.b16 %v773
        %v1540 = vunpack.c.l.b16 %v774
        %v1541 = vunpack.c.h.b16 %v774
        %v1542 = vunpack.c.l.b16 %v775
        %v1543 = vunpack.c.h.b16 %v775
        %v1544 = vunpack.c.l.b16 %v776
        %v1545 = vunpack.c.h.b16 %v776
        %v1546 = vunpack.c.l.b16 %v777
        %v1547 = vunpack.c.h.b16 %v777
        %v1548 = vunpack.c.l.b16 %v778
        %v1549 = vunpack.c.h.b16 %v778
        %v1550 = vunpack.c.l.b16 %v779
        %v1551 = vunpack.c.h.b16 %v779
        %v1552 = vunpack.c.l.b16 %v780
        %v1553 = vunpack.c.h.b16 %v780
        %v1554 = vunpack.c.l.b16 %v781
        %v1555 = vunpack.c.h.b16 %v781
        %v1556 = vunpack.c.l.b16 %v782
        %v1557 = vunpack.c.h.b16 %v782
        %v1558 = vunpack.c.l.b16 %v783
        %v1559 = vunpack.c.h.b16 %v783
        %v1560 = vunpack.c.l.b16 %v784
        %v1561 = vunpack.c.h.b16 %v784
        %v1562 = vunpack.c.l.b16 %v785
        %v1563 = vunpack.c.h.b16 %v785
        %v1564 = vunpack.c.l.b16 %v786
        %v1565 = vunpack.c.h.b16 %v786
        %v1566 = vunpack.c.l.b16 %v787
        %v1567 = vunpack.c.h.b16 %v787
        %v1568 = vunpack.c.l.b16 %v788
        %v1569 = vunpack.c.h.b16 %v788
        %v1570 = vunpack.c.l.b16 %v789
        %v1571 = vunpack.c.h.b16 %v789
        %v1572 = vunpack.c.l.b16 %v790
        %v1573 = vunpack.c.h.b16 %v790
        %v1574 = vunpack.c.l.b16 %v791
        %v1575 = vunpack.c.h.b16 %v791
        %v1576 = vunpack.c.l.b16 %v792
        %v1577 = vunpack.c.h.b16 %v792
        %v1578 = vunpack.c.l.b16 %v793
        %v1579 = vunpack.c.h.b16 %v793
        %v1580 = vunpack.c.l.b16 %v794
        %v1581 = vunpack.c.h.b16 %v794
        %v1582 = vunpack.c.l.b16 %v795
        %v1583 = vunpack.c.h.b16 %v795
        %v1584 = vunpack.c.l.b16 %v796
        %v1585 = vunpack.c.h.b16 %v796
        %v1586 = vunpack.c.l.b16 %v797
        %v1587 = vunpack.c.h.b16 %v797
        %v1588 = vunpack.c.l.b16 %v798
        %v1589 = vunpack.c.h.b16 %v798
        %v1590 = vunpack.c.l.b16 %v799
        %v1591 = vunpack.c.h.b16 %v799
        %v1592 = vunpack.c.l.b16 %v800
        %v1593 = vunpack.c.h.b16 %v800
        %v1594 = vunpack.c.l.b16 %v801
        %v1595 = vunpack.c.h.b16 %v801
        %v1596 = vunpack.c.l.b16 %v802
        %v1597 = vunpack.c.h.b16 %v802
        %v1598 = vunpack.c.l.b16 %v803
        %v1599 = vunpack.c.h.b16 %v803
        %v1600 = vpack.c.b16 %v1092, %v1088
        %v1601 = vpack.c.b16 %v1093, %v1089
        %v1602 = vpack.c.b16 %v1094, %v1090
        %v1603 = vpack.c.b16 %v1095, %v1091
        %v1604 = vpack.c.b16 %v1100, %v1096
        %v1605 = vpack.c.b16 %v1101, %v1097
        %v1606 = vpack.c.b16 %v1102, %v1098
        %v1607 = vpack.c.b16 %v1103, %v1099
        %v1608 = vpack.c.b16 %v1108, %v1104
        %v1609 = vpack.c.b16 %v1109, %v1105
        %v1610 = vpack.c.b16 %v1110, %v1106
        %v1611 = vpack.c.b16 %v1111, %v1107
        %v1612 = vpack.c.b16 %v1116, %v1112
        %v1613 = vpack.c.b16 %v1117, %v1113
        %v1614 = vpack.c.b16 %v1118, %v1114
        %v1615 = vpack.c.b16 %v1119, %v1115
        %v1616 = vpack.c.b16 %v1124, %v1120
        %v1617 = vpack.c.b16 %v1125, %v1121
        %v1618 = vpack.c.b16 %v1126, %v1122
        %v1619 = vpack.c.b16 %v1127, %v1123
        %v1620 = vpack.c.b16 %v1132, %v1128
        %v1621 = vpack.c.b16 %v1133, %v1129
        %v1622 = vpack.c.b16 %v1134, %v1130
        %v1623 = vpack.c.b16 %v1135, %v1131
        %v1624 = vpack.c.b16 %v1140, %v1136
        %v1625 = vpack.c.b16 %v1141, %v1137
        %v1626 = vpack.c.b16 %v1142, %v1138
        %v1627 = vpack.c.b16 %v1143, %v1139
        %v1628 = vpack.c.b16 %v1148, %v1144
        %v1629 = vpack.c.b16 %v1149, %v1145
        %v1630 = vpack.c.b16 %v1150, %v1146
        %v1631 = vpack.c.b16 %v1151, %v1147
        %v1632 = vpack.c.b16 %v1156, %v1152
        %v1633 = vpack.c.b16 %v1157, %v1153
        %v1634 = vpack.c.b16 %v1158, %v1154
        %v1635 = vpack.c.b16 %v1159, %v1155
        %v1636 = vpack.c.b16 %v1164, %v1160
        %v1637 = vpack.c.b16 %v1165, %v1161
        %v1638 = vpack.c.b16 %v1166, %v1162
        %v1639 = vpack.c.b16 %v1167, %v1163
        %v1640 = vpack.c.b16 %v1172, %v1168
        %v1641 = vpack.c.b16 %v1173, %v1169
        %v1642 = vpack.c.b16 %v1174, %v1170
        %v1643 = vpack.c.b16 %v1175, %v1171
        %v1644 = vpack.c.b16 %v1180, %v1176
        %v1645 = vpack.c.b16 %v1181, %v1177
        %v1646 = vpack.c.b16 %v1182, %v1178
        %v1647 = vpack.c.b16 %v1183, %v1179
        %v1648 = vpack.c.b16 %v1188, %v1184
        %v1649 = vpack.c.b16 %v1189, %v1185
        %v1650 = vpack.c.b16 %v1190, %v1186
        %v1651 = vpack.c.b16 %v1191, %v1187
        %v1652 = vpack.c.b16 %v1196, %v1192
        %v1653 = vpack.c.b16 %v1197, %v1193
        %v1654 = vpack.c.b16 %v1198, %v1194
        %v1655 = vpack.c.b16 %v1199, %v1195
        %v1656 = vpack.c.b16 %v1204, %v1200
        %v1657 = vpack.c.b16 %v1205, %v1201
        %v1658 = vpack.c.b16 %v1206, %v1202
        %v1659 = vpack.c.b16 %v1207, %v1203
        %v1660 = vpack.c.b16 %v1212, %v1208
        %v1661 = vpack.c.b16 %v1213, %v1209
        %v1662 = vpack.c.b16 %v1214, %v1210
        %v1663 = vpack.c.b16 %v1215, %v1211
        %v1664 = vpack.c.b16 %v1220, %v1216
        %v1665 = vpack.c.b16 %v1221, %v1217
        %v1666 = vpack.c.b16 %v1222, %v1218
        %v1667 = vpack.c.b16 %v1223, %v1219
        %v1668 = vpack.c.b16 %v1228, %v1224
        %v1669 = vpack.c.b16 %v1229, %v1225
        %v1670 = vpack.c.b16 %v1230, %v1226
        %v1671 = vpack.c.b16 %v1231, %v1227
        %v1672 = vpack.c.b16 %v1236, %v1232
        %v1673 = vpack.c.b16 %v1237, %v1233
        %v1674 = vpack.c.b16 %v1238, %v1234
        %v1675 = vpack.c.b16 %v1239, %v1235
        %v1676 = vpack.c.b16 %v1244, %v1240
        %v1677 = vpack.c.b16 %v1245, %v1241
        %v1678 = vpack.c.b16 %v1246, %v1242
        %v1679 = vpack.c.b16 %v1247, %v1243
        %v1680 = vpack.c.b16 %v1252, %v1248
        %v1681 = vpack.c.b16 %v1253, %v1249
        %v1682 = vpack.c.b16 %v1254, %v1250
        %v1683 = vpack.c.b16 %v1255, %v1251
        %v1684 = vpack.c.b16 %v1260, %v1256
        %v1685 = vpack.c.b16 %v1261, %v1257
        %v1686 = vpack.c.b16 %v1262, %v1258
        %v1687 = vpack.c.b16 %v1263, %v1259
        %v1688 = vpack.c.b16 %v1268, %v1264
        %v1689 = vpack.c.b16 %v1269, %v1265
        %v1690 = vpack.c.b16 %v1270, %v1266
        %v1691 = vpack.c.b16 %v1271, %v1267
        %v1692 = vpack.c.b16 %v1276, %v1272
        %v1693 = vpack.c.b16 %v1277, %v1273
        %v1694 = vpack.c.b16 %v1278, %v1274
        %v1695 = vpack.c.b16 %v1279, %v1275
        %v1696 = vpack.c.b16 %v1284, %v1280
        %v1697 = vpack.c.b16 %v1285, %v1281
        %v1698 = vpack.c.b16 %v1286, %v1282
        %v1699 = vpack.c.b16 %v1287, %v1283
        %v1700 = vpack.c.b16 %v1292, %v1288
        %v1701 = vpack.c.b16 %v1293, %v1289
        %v1702 = vpack.c.b16 %v1294, %v1290
        %v1703 = vpack.c.b16 %v1295, %v1291
        %v1704 = vpack.c.b16 %v1300, %v1296
        %v1705 = vpack.c.b16 %v1301, %v1297
        %v1706 = vpack.c.b16 %v1302, %v1298
        %v1707 = vpack.c.b16 %v1303, %v1299
        %v1708 = vpack.c.b16 %v1308, %v1304
        %v1709 = vpack.c.b16 %v1309, %v1305
        %v1710 = vpack.c.b16 %v1310, %v1306
        %v1711 = vpack.c.b16 %v1311, %v1307
        %v1712 = vpack.c.b16 %v1316, %v1312
        %v1713 = vpack.c.b16 %v1317, %v1313
        %v1714 = vpack.c.b16 %v1318, %v1314
        %v1715 = vpack.c.b16 %v1319, %v1315
        %v1716 = vpack.c.b16 %v1324, %v1320
        %v1717 = vpack.c.b16 %v1325, %v1321
        %v1718 = vpack.c.b16 %v1326, %v1322
        %v1719 = vpack.c.b16 %v1327, %v1323
        %v1720 = vpack.c.b16 %v1332, %v1328
        %v1721 = vpack.c.b16 %v1333, %v1329
        %v1722 = vpack.c.b16 %v1334, %v1330
        %v1723 = vpack.c.b16 %v1335, %v1331
        %v1724 = vpack.c.b16 %v1340, %v1336
        %v1725 = vpack.c.b16 %v1341, %v1337
        %v1726 = vpack.c.b16 %v1342, %v1338
        %v1727 = vpack.c.b16 %v1343, %v1339
        %v1728 = vpack.c.b16 %v1348, %v1344
        %v1729 = vpack.c.b16 %v1349, %v1345
        %v1730 = vpack.c.b16 %v1350, %v1346
        %v1731 = vpack.c.b16 %v1351, %v1347
        %v1732 = vpack.c.b16 %v1356, %v1352
        %v1733 = vpack.c.b16 %v1357, %v1353
        %v1734 = vpack.c.b16 %v1358, %v1354
        %v1735 = vpack.c.b16 %v1359, %v1355
        %v1736 = vpack.c.b16 %v1364, %v1360
        %v1737 = vpack.c.b16 %v1365, %v1361
        %v1738 = vpack.c.b16 %v1366, %v1362
        %v1739 = vpack.c.b16 %v1367, %v1363
        %v1740 = vpack.c.b16 %v1372, %v1368
        %v1741 = vpack.c.b16 %v1373, %v1369
        %v1742 = vpack.c.b16 %v1374, %v1370
        %v1743 = vpack.c.b16 %v1375, %v1371
        %v1744 = vpack.c.b16 %v1380, %v1376
        %v1745 = vpack.c.b16 %v1381, %v1377
        %v1746 = vpack.c.b16 %v1382, %v1378
        %v1747 = vpack.c.b16 %v1383, %v1379
        %v1748 = vpack.c.b16 %v1388, %v1384
        %v1749 = vpack.c.b16 %v1389, %v1385
        %v1750 = vpack.c.b16 %v1390, %v1386
        %v1751 = vpack.c.b16 %v1391, %v1387
        %v1752 = vpack.c.b16 %v1396, %v1392
        %v1753 = vpack.c.b16 %v1397, %v1393
        %v1754 = vpack.c.b16 %v1398, %v1394
        %v1755 = vpack.c.b16 %v1399, %v1395
        %v1756 = vpack.c.b16 %v1404, %v1400
        %v1757 = vpack.c.b16 %v1405, %v1401
        %v1758 = vpack.c.b16 %v1406, %v1402
        %v1759 = vpack.c.b16 %v1407, %v1403
        %v1760 = vpack.c.b16 %v1412, %v1408
        %v1761 = vpack.c.b16 %v1413, %v1409
        %v1762 = vpack.c.b16 %v1414, %v1410
        %v1763 = vpack.c.b16 %v1415, %v1411
        %v1764 = vpack.c.b16 %v1420, %v1416
        %v1765 = vpack.c.b16 %v1421, %v1417
        %v1766 = vpack.c.b16 %v1422, %v1418
        %v1767 = vpack.c.b16 %v1423, %v1419
        %v1768 = vpack.c.b16 %v1428, %v1424
        %v1769 = vpack.c.b16 %v1429, %v1425
        %v1770 = vpack.c.b16 %v1430, %v1426
        %v1771 = vpack.c.b16 %v1431, %v1427
        %v1772 = vpack.c.b16 %v1436, %v1432
        %v1773 = vpack.c.b16 %v1437, %v1433
        %v1774 = vpack.c.b16 %v1438, %v1434
        %v1775 = vpack.c.b16 %v1439, %v1435
        %v1776 = vpack.c.b16 %v1444, %v1440
        %v1777 = vpack.c.b16 %v1445, %v1441
        %v1778 = vpack.c.b16 %v1446, %v1442
        %v1779 = vpack.c.b16 %v1447, %v1443
        %v1780 = vpack.c.b16 %v1452, %v1448
        %v1781 = vpack.c.b16 %v1453, %v1449
        %v1782 = vpack.c.b16 %v1454, %v1450
        %v1783 = vpack.c.b16 %v1455, %v1451
        %v1784 = vpack.c.b16 %v1460, %v1456
        %v1785 = vpack.c.b16 %v1461, %v1457
        %v1786 = vpack.c.b16 %v1462, %v1458
        %v1787 = vpack.c.b16 %v1463, %v1459
        %v1788 = vpack.c.b16 %v1468, %v1464
        %v1789 = vpack.c.b16 %v1469, %v1465
        %v1790 = vpack.c.b16 %v1470, %v1466
        %v1791 = vpack.c.b16 %v1471, %v1467
        %v1792 = vpack.c.b16 %v1476, %v1472
        %v1793 = vpack.c.b16 %v1477, %v1473
        %v1794 = vpack.c.b16 %v1478, %v1474
        %v1795 = vpack.c.b16 %v1479, %v1475
        %v1796 = vpack.c.b16 %v1484, %v1480
        %v1797 = vpack.c.b16 %v1485, %v1481
        %v1798 = vpack.c.b16 %v1486, %v1482
        %v1799 = vpack.c.b16 %v1487, %v1483
        %v1800 = vpack.c.b16 %v1492, %v1488
        %v1801 = vpack.c.b16 %v1493, %v1489
        %v1802 = vpack.c.b16 %v1494, %v1490
        %v1803 = vpack.c.b16 %v1495, %v1491
        %v1804 = vpack.c.b16 %v1500, %v1496
        %v1805 = vpack.c.b16 %v1501, %v1497
        %v1806 = vpack.c.b16 %v1502, %v1498
        %v1807 = vpack.c.b16 %v1503, %v1499
        %v1808 = vpack.c.b16 %v1508, %v1504
        %v1809 = vpack.c.b16 %v1509, %v1505
        %v1810 = vpack.c.b16 %v1510, %v1506
        %v1811 = vpack.c.b16 %v1511, %v1507
        %v1812 = vpack.c.b16 %v1516, %v1512
        %v1813 = vpack.c.b16 %v1517, %v1513
        %v1814 = vpack.c.b16 %v1518, %v1514
        %v1815 = vpack.c.b16 %v1519, %v1515
        %v1816 = vpack.c.b16 %v1524, %v1520
        %v1817 = vpack.c.b16 %v1525, %v1521
        %v1818 = vpack.c.b16 %v1526, %v1522
        %v1819 = vpack.c.b16 %v1527, %v1523
        %v1820 = vpack.c.b16 %v1532, %v1528
        %v1821 = vpack.c.b16 %v1533, %v1529
        %v1822 = vpack.c.b16 %v1534, %v1530
        %v1823 = vpack.c.b16 %v1535, %v1531
        %v1824 = vpack.c.b16 %v1540, %v1536
        %v1825 = vpack.c.b16 %v1541, %v1537
        %v1826 = vpack.c.b16 %v1542, %v1538
        %v1827 = vpack.c.b16 %v1543, %v1539
        %v1828 = vpack.c.b16 %v1548, %v1544
        %v1829 = vpack.c.b16 %v1549, %v1545
        %v1830 = vpack.c.b16 %v1550, %v1546
        %v1831 = vpack.c.b16 %v1551, %v1547
        %v1832 = vpack.c.b16 %v1556, %v1552
        %v1833 = vpack.c.b16 %v1557, %v1553
        %v1834 = vpack.c.b16 %v1558, %v1554
        %v1835 = vpack.c.b16 %v1559, %v1555
        %v1836 = vpack.c.b16 %v1564, %v1560
        %v1837 = vpack.c.b16 %v1565, %v1561
        %v1838 = vpack.c.b16 %v1566, %v1562
        %v1839 = vpack.c.b16 %v1567, %v1563
        %v1840 = vpack.c.b16 %v1572, %v1568
        %v1841 = vpack.c.b16 %v1573, %v1569
        %v1842 = vpack.c.b16 %v1574, %v1570
        %v1843 = vpack.c.b16 %v1575, %v1571
        %v1844 = vpack.c.b16 %v1580, %v1576
        %v1845 = vpack.c.b16 %v1581, %v1577
        %v1846 = vpack.c.b16 %v1582, %v1578
        %v1847 = vpack.c.b16 %v1583, %v1579
        %v1848 = vpack.c.b16 %v1588, %v1584
        %v1849 = vpack.c.b16 %v1589, %v1585
        %v1850 = vpack.c.b16 %v1590, %v1586
        %v1851 = vpack.c.b16 %v1591, %v1587
        %v1852 = vpack.c.b16 %v1596, %v1592
        %v1853 = vpack.c.b16 %v1597, %v1593
        %v1854 = vpack.c.b16 %v1598, %v1594
        %v1855 = vpack.c.b16 %v1599, %v1595
        %2112 = vmatprep.subr.bf16.mxu0 %v1601
        %2113 = vmatpush1.bf16.msra.mxu0 %v1600
        %2114 = vmatprep.subr.bf16.mxu0 %v1605
        %2115 = vmatpush1.bf16.msra.mxu0 %v1604
        %2116 = vmatprep.subr.bf16.mxu0 %v1609
        %2117 = vmatpush1.bf16.msra.mxu0 %v1608
        %2118 = vmatprep.subr.bf16.mxu0 %v1613
        %2119 = vmatpush1.bf16.msra.mxu0 %v1612
        %2120 = vmatprep.subr.bf16.mxu0 %v1617
        %2121 = vmatpush1.bf16.msra.mxu0 %v1616
        %2122 = vmatprep.subr.bf16.mxu0 %v1621
        %2123 = vmatpush1.bf16.msra.mxu0 %v1620
        %2124 = vmatprep.subr.bf16.mxu0 %v1625
        %2125 = vmatpush1.bf16.msra.mxu0 %v1624
        %2126 = vmatprep.subr.bf16.mxu0 %v1629
        %2127 = vmatpush1.bf16.msra.mxu0 %v1628
        %2128 = vmatprep.subr.bf16.mxu0 %v1633
        %2129 = vmatpush1.bf16.msra.mxu0 %v1632
        %2130 = vmatprep.subr.bf16.mxu0 %v1637
        %2131 = vmatpush1.bf16.msra.mxu0 %v1636
        %2132 = vmatprep.subr.bf16.mxu0 %v1641
        %2133 = vmatpush1.bf16.msra.mxu0 %v1640
        %2134 = vmatprep.subr.bf16.mxu0 %v1645
        %2135 = vmatpush1.bf16.msra.mxu0 %v1644
        %2136 = vmatprep.subr.bf16.mxu0 %v1649
        %2137 = vmatpush1.bf16.msra.mxu0 %v1648
        %2138 = vmatprep.subr.bf16.mxu0 %v1653
        %2139 = vmatpush1.bf16.msra.mxu0 %v1652
        %2140 = vmatprep.subr.bf16.mxu0 %v1657
        %2141 = vmatpush1.bf16.msra.mxu0 %v1656
        %2142 = vmatprep.subr.bf16.mxu0 %v1661
        %2143 = vmatpush1.bf16.msra.mxu0 %v1660
        %2144 = vmatprep.mubr.bf16.mxu0 %v817
        %2145 = vmatmul.mubr.bf16.gmra.mrb[0].mxu0 %v816
        %v2146 = vpop.f32.mrb[0].mxu0
        %v2147 = vadd.f32 0.0, %v2146
        %v2148 = vpop.f32.mrb[0].mxu0
        %v2149 = vadd.f32 0.0, %v2148
        %v2150 = vpop.f32.mrb[0].mxu0
        %v2151 = vpop.f32.mrb[0].mxu0
        %2152 = vdwg.mxu0
        %2153 = vmatprep.subr.bf16.mxu0 %v1665
        %2154 = vmatpush1.bf16.msra.mxu0 %v1664
        %2155 = vmatprep.subr.bf16.mxu0 %v1669
        %2156 = vmatpush1.bf16.msra.mxu0 %v1668
        %2157 = vmatprep.subr.bf16.mxu0 %v1673
        %2158 = vmatpush1.bf16.msra.mxu0 %v1672
        %2159 = vmatprep.subr.bf16.mxu0 %v1677
        %2160 = vmatpush1.bf16.msra.mxu0 %v1676
        %2161 = vmatprep.subr.bf16.mxu0 %v1681
        %2162 = vmatpush1.bf16.msra.mxu0 %v1680
        %2163 = vmatprep.subr.bf16.mxu0 %v1685
        %2164 = vmatpush1.bf16.msra.mxu0 %v1684
        %2165 = vmatprep.subr.bf16.mxu0 %v1689
        %2166 = vmatpush1.bf16.msra.mxu0 %v1688
        %2167 = vmatprep.subr.bf16.mxu0 %v1693
        %2168 = vmatpush1.bf16.msra.mxu0 %v1692
        %2169 = vmatprep.subr.bf16.mxu0 %v1697
        %2170 = vmatpush1.bf16.msra.mxu0 %v1696
        %2171 = vmatprep.subr.bf16.mxu0 %v1701
        %2172 = vmatpush1.bf16.msra.mxu0 %v1700
        %2173 = vmatprep.subr.bf16.mxu0 %v1705
        %2174 = vmatpush1.bf16.msra.mxu0 %v1704
        %2175 = vmatprep.subr.bf16.mxu0 %v1709
        %2176 = vmatpush1.bf16.msra.mxu0 %v1708
        %2177 = vmatprep.subr.bf16.mxu0 %v1713
        %2178 = vmatpush1.bf16.msra.mxu0 %v1712
        %2179 = vmatprep.subr.bf16.mxu0 %v1717
        %2180 = vmatpush1.bf16.msra.mxu0 %v1716
        %2181 = vmatprep.subr.bf16.mxu0 %v1721
        %2182 = vmatpush1.bf16.msra.mxu0 %v1720
        %2183 = vmatprep.subr.bf16.mxu0 %v1725
        %2184 = vmatpush1.bf16.msra.mxu0 %v1724
        %2185 = vmatprep.mubr.bf16.mxu0 %v819
        %2186 = vmatmul.mubr.bf16.gmra.mrb[0].mxu0 %v818
        %v2187 = vpop.f32.mrb[0].mxu0
        %v2188 = vadd.f32 %v2147, %v2187
        %v2189 = vpop.f32.mrb[0].mxu0
        %v2190 = vadd.f32 %v2149, %v2189
        %v2191 = vpop.f32.mrb[0].mxu0
        %v2192 = vpop.f32.mrb[0].mxu0
        %2193 = vdwg.mxu0
        %2194 = vmatprep.subr.bf16.mxu0 %v1729
        %2195 = vmatpush1.bf16.msra.mxu0 %v1728
        %2196 = vmatprep.subr.bf16.mxu0 %v1733
        %2197 = vmatpush1.bf16.msra.mxu0 %v1732
        %2198 = vmatprep.subr.bf16.mxu0 %v1737
        %2199 = vmatpush1.bf16.msra.mxu0 %v1736
        %2200 = vmatprep.subr.bf16.mxu0 %v1741
        %2201 = vmatpush1.bf16.msra.mxu0 %v1740
        %2202 = vmatprep.subr.bf16.mxu0 %v1745
        %2203 = vmatpush1.bf16.msra.mxu0 %v1744
        %2204 = vmatprep.subr.bf16.mxu0 %v1749
        %2205 = vmatpush1.bf16.msra.mxu0 %v1748
        %2206 = vmatprep.subr.bf16.mxu0 %v1753
        %2207 = vmatpush1.bf16.msra.mxu0 %v1752
        %2208 = vmatprep.subr.bf16.mxu0 %v1757
        %2209 = vmatpush1.bf16.msra.mxu0 %v1756
        %2210 = vmatprep.subr.bf16.mxu0 %v1761
        %2211 = vmatpush1.bf16.msra.mxu0 %v1760
        %2212 = vmatprep.subr.bf16.mxu0 %v1765
        %2213 = vmatpush1.bf16.msra.mxu0 %v1764
        %2214 = vmatprep.subr.bf16.mxu0 %v1769
        %2215 = vmatpush1.bf16.msra.mxu0 %v1768
        %2216 = vmatprep.subr.bf16.mxu0 %v1773
        %2217 = vmatpush1.bf16.msra.mxu0 %v1772
        %2218 = vmatprep.subr.bf16.mxu0 %v1777
        %2219 = vmatpush1.bf16.msra.mxu0 %v1776
        %2220 = vmatprep.subr.bf16.mxu0 %v1781
        %2221 = vmatpush1.bf16.msra.mxu0 %v1780
        %2222 = vmatprep.subr.bf16.mxu0 %v1785
        %2223 = vmatpush1.bf16.msra.mxu0 %v1784
        %2224 = vmatprep.subr.bf16.mxu0 %v1789
        %2225 = vmatpush1.bf16.msra.mxu0 %v1788
        %2226 = vmatprep.mubr.bf16.mxu0 %v821
        %2227 = vmatmul.mubr.bf16.gmra.mrb[0].mxu0 %v820
        %v2228 = vpop.f32.mrb[0].mxu0
        %v2229 = vadd.f32 %v2188, %v2228
        %v2230 = vpop.f32.mrb[0].mxu0
        %v2231 = vadd.f32 %v2190, %v2230
        %v2232 = vpop.f32.mrb[0].mxu0
        %v2233 = vpop.f32.mrb[0].mxu0
        %2234 = vdwg.mxu0
        %2235 = vmatprep.subr.bf16.mxu0 %v1793
        %2236 = vmatpush1.bf16.msra.mxu0 %v1792
        %2237 = vmatprep.subr.bf16.mxu0 %v1797
        %2238 = vmatpush1.bf16.msra.mxu0 %v1796
        %2239 = vmatprep.subr.bf16.mxu0 %v1801
        %2240 = vmatpush1.bf16.msra.mxu0 %v1800
        %2241 = vmatprep.subr.bf16.mxu0 %v1805
        %2242 = vmatpush1.bf16.msra.mxu0 %v1804
        %2243 = vmatprep.subr.bf16.mxu0 %v1809
        %2244 = vmatpush1.bf16.msra.mxu0 %v1808
        %2245 = vmatprep.subr.bf16.mxu0 %v1813
        %2246 = vmatpush1.bf16.msra.mxu0 %v1812
        %2247 = vmatprep.subr.bf16.mxu0 %v1817
        %2248 = vmatpush1.bf16.msra.mxu0 %v1816
        %2249 = vmatprep.subr.bf16.mxu0 %v1821
        %2250 = vmatpush1.bf16.msra.mxu0 %v1820
        %2251 = vmatprep.subr.bf16.mxu0 %v1825
        %2252 = vmatpush1.bf16.msra.mxu0 %v1824
        %2253 = vmatprep.subr.bf16.mxu0 %v1829
        %2254 = vmatpush1.bf16.msra.mxu0 %v1828
        %2255 = vmatprep.subr.bf16.mxu0 %v1833
        %2256 = vmatpush1.bf16.msra.mxu0 %v1832
        %2257 = vmatprep.subr.bf16.mxu0 %v1837
        %2258 = vmatpush1.bf16.msra.mxu0 %v1836
        %2259 = vmatprep.subr.bf16.mxu0 %v1841
        %2260 = vmatpush1.bf16.msra.mxu0 %v1840
        %2261 = vmatprep.subr.bf16.mxu0 %v1845
        %2262 = vmatpush1.bf16.msra.mxu0 %v1844
        %2263 = vmatprep.subr.bf16.mxu0 %v1849
        %2264 = vmatpush1.bf16.msra.mxu0 %v1848
        %2265 = vmatprep.subr.bf16.mxu0 %v1853
        %2266 = vmatpush1.bf16.msra.mxu0 %v1852
        %2267 = vmatprep.mubr.bf16.mxu0 %v823
        %2268 = vmatmul.mubr.bf16.gmra.mrb[0].mxu0 %v822
        %v2269 = vpop.f32.mrb[0].mxu0
        %v2270 = vadd.f32 %v2229, %v2269
        %v2271 = vpop.f32.mrb[0].mxu0
        %v2272 = vadd.f32 %v2231, %v2271
        %v2273 = vpop.f32.mrb[0].mxu0
        %v2274 = vpop.f32.mrb[0].mxu0
        %2275 = vdwg.mxu0
        %2276 = vmatprep.subr.bf16.mxu0 %v1603
        %2277 = vmatpush1.bf16.msra.mxu0 %v1602
        %2278 = vmatprep.subr.bf16.mxu0 %v1607
        %2279 = vmatpush1.bf16.msra.mxu0 %v1606
        %2280 = vmatprep.subr.bf16.mxu0 %v1611
        %2281 = vmatpush1.bf16.msra.mxu0 %v1610
        %2282 = vmatprep.subr.bf16.mxu0 %v1615
        %2283 = vmatpush1.bf16.msra.mxu0 %v1614
        %2284 = vmatprep.subr.bf16.mxu0 %v1619
        %2285 = vmatpush1.bf16.msra.mxu0 %v1618
        %2286 = vmatprep.subr.bf16.mxu0 %v1623
        %2287 = vmatpush1.bf16.msra.mxu0 %v1622
        %2288 = vmatprep.subr.bf16.mxu0 %v1627
        %2289 = vmatpush1.bf16.msra.mxu0 %v1626
        %2290 = vmatprep.subr.bf16.mxu0 %v1631
        %2291 = vmatpush1.bf16.msra.mxu0 %v1630
        %2292 = vmatprep.subr.bf16.mxu0 %v1635
        %2293 = vmatpush1.bf16.msra.mxu0 %v1634
        %2294 = vmatprep.subr.bf16.mxu0 %v1639
        %2295 = vmatpush1.bf16.msra.mxu0 %v1638
        %2296 = vmatprep.subr.bf16.mxu0 %v1643
        %2297 = vmatpush1.bf16.msra.mxu0 %v1642
        %2298 = vmatprep.subr.bf16.mxu0 %v1647
        %2299 = vmatpush1.bf16.msra.mxu0 %v1646
        %2300 = vmatprep.subr.bf16.mxu0 %v1651
        %2301 = vmatpush1.bf16.msra.mxu0 %v1650
        %2302 = vmatprep.subr.bf16.mxu0 %v1655
        %2303 = vmatpush1.bf16.msra.mxu0 %v1654
        %2304 = vmatprep.subr.bf16.mxu0 %v1659
        %2305 = vmatpush1.bf16.msra.mxu0 %v1658
        %2306 = vmatprep.subr.bf16.mxu0 %v1663
        %2307 = vmatpush1.bf16.msra.mxu0 %v1662
        %2308 = vmatprep.mubr.bf16.mxu0 %v817
        %2309 = vmatmul.mubr.bf16.gmra.mrb[0].mxu0 %v816
        %v2310 = vpop.f32.mrb[0].mxu0
        %v2311 = vadd.f32 0.0, %v2310
        %v2312 = vpop.f32.mrb[0].mxu0
        %v2313 = vadd.f32 0.0, %v2312
        %v2314 = vpop.f32.mrb[0].mxu0
        %v2315 = vpop.f32.mrb[0].mxu0
        %2316 = vdwg.mxu0
        %2317 = vmatprep.subr.bf16.mxu0 %v1667
        %2318 = vmatpush1.bf16.msra.mxu0 %v1666
        %2319 = vmatprep.subr.bf16.mxu0 %v1671
        %2320 = vmatpush1.bf16.msra.mxu0 %v1670
        %2321 = vmatprep.subr.bf16.mxu0 %v1675
        %2322 = vmatpush1.bf16.msra.mxu0 %v1674
        %2323 = vmatprep.subr.bf16.mxu0 %v1679
        %2324 = vmatpush1.bf16.msra.mxu0 %v1678
        %2325 = vmatprep.subr.bf16.mxu0 %v1683
        %2326 = vmatpush1.bf16.msra.mxu0 %v1682
        %2327 = vmatprep.subr.bf16.mxu0 %v1687
        %2328 = vmatpush1.bf16.msra.mxu0 %v1686
        %2329 = vmatprep.subr.bf16.mxu0 %v1691
        %2330 = vmatpush1.bf16.msra.mxu0 %v1690
        %2331 = vmatprep.subr.bf16.mxu0 %v1695
        %2332 = vmatpush1.bf16.msra.mxu0 %v1694
        %2333 = vmatprep.subr.bf16.mxu0 %v1699
        %2334 = vmatpush1.bf16.msra.mxu0 %v1698
        %2335 = vmatprep.subr.bf16.mxu0 %v1703
        %2336 = vmatpush1.bf16.msra.mxu0 %v1702
        %2337 = vmatprep.subr.bf16.mxu0 %v1707
        %2338 = vmatpush1.bf16.msra.mxu0 %v1706
        %2339 = vmatprep.subr.bf16.mxu0 %v1711
        %2340 = vmatpush1.bf16.msra.mxu0 %v1710
        %2341 = vmatprep.subr.bf16.mxu0 %v1715
        %2342 = vmatpush1.bf16.msra.mxu0 %v1714
        %2343 = vmatprep.subr.bf16.mxu0 %v1719
        %2344 = vmatpush1.bf16.msra.mxu0 %v1718
        %2345 = vmatprep.subr.bf16.mxu0 %v1723
        %2346 = vmatpush1.bf16.msra.mxu0 %v1722
        %2347 = vmatprep.subr.bf16.mxu0 %v1727
        %2348 = vmatpush1.bf16.msra.mxu0 %v1726
        %2349 = vmatprep.mubr.bf16.mxu0 %v819
        %2350 = vmatmul.mubr.bf16.gmra.mrb[0].mxu0 %v818
        %v2351 = vpop.f32.mrb[0].mxu0
        %v2352 = vadd.f32 %v2311, %v2351
        %v2353 = vpop.f32.mrb[0].mxu0
        %v2354 = vadd.f32 %v2313, %v2353
        %v2355 = vpop.f32.mrb[0].mxu0
        %v2356 = vpop.f32.mrb[0].mxu0
        %2357 = vdwg.mxu0
        %2358 = vmatprep.subr.bf16.mxu0 %v1731
        %2359 = vmatpush1.bf16.msra.mxu0 %v1730
        %2360 = vmatprep.subr.bf16.mxu0 %v1735
        %2361 = vmatpush1.bf16.msra.mxu0 %v1734
        %2362 = vmatprep.subr.bf16.mxu0 %v1739
        %2363 = vmatpush1.bf16.msra.mxu0 %v1738
        %2364 = vmatprep.subr.bf16.mxu0 %v1743
        %2365 = vmatpush1.bf16.msra.mxu0 %v1742
        %2366 = vmatprep.subr.bf16.mxu0 %v1747
        %2367 = vmatpush1.bf16.msra.mxu0 %v1746
        %2368 = vmatprep.subr.bf16.mxu0 %v1751
        %2369 = vmatpush1.bf16.msra.mxu0 %v1750
        %2370 = vmatprep.subr.bf16.mxu0 %v1755
        %2371 = vmatpush1.bf16.msra.mxu0 %v1754
        %2372 = vmatprep.subr.bf16.mxu0 %v1759
        %2373 = vmatpush1.bf16.msra.mxu0 %v1758
        %2374 = vmatprep.subr.bf16.mxu0 %v1763
        %2375 = vmatpush1.bf16.msra.mxu0 %v1762
        %2376 = vmatprep.subr.bf16.mxu0 %v1767
        %2377 = vmatpush1.bf16.msra.mxu0 %v1766
        %2378 = vmatprep.subr.bf16.mxu0 %v1771
        %2379 = vmatpush1.bf16.msra.mxu0 %v1770
        %2380 = vmatprep.subr.bf16.mxu0 %v1775
        %2381 = vmatpush1.bf16.msra.mxu0 %v1774
        %2382 = vmatprep.subr.bf16.mxu0 %v1779
        %2383 = vmatpush1.bf16.msra.mxu0 %v1778
        %2384 = vmatprep.subr.bf16.mxu0 %v1783
        %2385 = vmatpush1.bf16.msra.mxu0 %v1782
        %2386 = vmatprep.subr.bf16.mxu0 %v1787
        %2387 = vmatpush1.bf16.msra.mxu0 %v1786
        %2388 = vmatprep.subr.bf16.mxu0 %v1791
        %2389 = vmatpush1.bf16.msra.mxu0 %v1790
        %2390 = vmatprep.mubr.bf16.mxu0 %v821
        %2391 = vmatmul.mubr.bf16.gmra.mrb[0].mxu0 %v820
        %v2392 = vpop.f32.mrb[0].mxu0
        %v2393 = vadd.f32 %v2352, %v2392
        %v2394 = vpop.f32.mrb[0].mxu0
        %v2395 = vadd.f32 %v2354, %v2394
        %v2396 = vpop.f32.mrb[0].mxu0
        %v2397 = vpop.f32.mrb[0].mxu0
        %2398 = vdwg.mxu0
        %2399 = vmatprep.subr.bf16.mxu0 %v1795
        %2400 = vmatpush1.bf16.msra.mxu0 %v1794
        %2401 = vmatprep.subr.bf16.mxu0 %v1799
        %2402 = vmatpush1.bf16.msra.mxu0 %v1798
        %2403 = vmatprep.subr.bf16.mxu0 %v1803
        %2404 = vmatpush1.bf16.msra.mxu0 %v1802
        %2405 = vmatprep.subr.bf16.mxu0 %v1807
        %2406 = vmatpush1.bf16.msra.mxu0 %v1806
        %2407 = vmatprep.subr.bf16.mxu0 %v1811
        %2408 = vmatpush1.bf16.msra.mxu0 %v1810
        %2409 = vmatprep.subr.bf16.mxu0 %v1815
        %2410 = vmatpush1.bf16.msra.mxu0 %v1814
        %2411 = vmatprep.subr.bf16.mxu0 %v1819
        %2412 = vmatpush1.bf16.msra.mxu0 %v1818
        %2413 = vmatprep.subr.bf16.mxu0 %v1823
        %2414 = vmatpush1.bf16.msra.mxu0 %v1822
        %2415 = vmatprep.subr.bf16.mxu0 %v1827
        %2416 = vmatpush1.bf16.msra.mxu0 %v1826
        %2417 = vmatprep.subr.bf16.mxu0 %v1831
        %2418 = vmatpush1.bf16.msra.mxu0 %v1830
        %2419 = vmatprep.subr.bf16.mxu0 %v1835
        %2420 = vmatpush1.bf16.msra.mxu0 %v1834
        %2421 = vmatprep.subr.bf16.mxu0 %v1839
        %2422 = vmatpush1.bf16.msra.mxu0 %v1838
        %2423 = vmatprep.subr.bf16.mxu0 %v1843
        %2424 = vmatpush1.bf16.msra.mxu0 %v1842
        %2425 = vmatprep.subr.bf16.mxu0 %v1847
        %2426 = vmatpush1.bf16.msra.mxu0 %v1846
        %2427 = vmatprep.subr.bf16.mxu0 %v1851
        %2428 = vmatpush1.bf16.msra.mxu0 %v1850
        %2429 = vmatprep.subr.bf16.mxu0 %v1855
        %2430 = vmatpush1.bf16.msra.mxu0 %v1854
        %2431 = vmatprep.mubr.bf16.mxu0 %v823
        %2432 = vmatmul.mubr.bf16.gmra.mrb[0].mxu0 %v822
        %v2433 = vpop.f32.mrb[0].mxu0
        %v2434 = vadd.f32 %v2393, %v2433
        %v2435 = vpop.f32.mrb[0].mxu0
        %v2436 = vadd.f32 %v2395, %v2435
        %v2437 = vpop.f32.mrb[0].mxu0
        %v2438 = vpop.f32.mrb[0].mxu0
        %2439 = vdwg.mxu0
        %2440 = vst [vmem:[%s234] sm:$0xff] %v2270
        %2441 = vst [vmem:[%s234 + $0x8] sm:$0xff] %v2272
        %2442 = vst [vmem:[%s234 + $0x10] sm:$0xff] %v2434
        %2443 = vst [vmem:[%s234 + $0x18] sm:$0xff] %v2436
        %s2444 = sand.u32 %s114, 1
        %s2445 = scalar_lea.sflag [#allocation5], %s2444
        %s2446 = sand.u32 %s114, 1
        %s2447 = smul.addr %s2446, 32
        %s2448 = scalar_lea.vmem [#allocation9], %s2447
        // Predicated region
        $region49: #{tpu_custom_call.1} parent=31 // pred_check
          %p2449 = pneg %p124
        $region50: #{tpu_custom_call.1} parent=31 // pred_check_branch
          %2451 = sbr.rel (%p2449) target = $region52
        $region51: #{tpu_custom_call.1} parent=31 // pred_region
          %s2452 = smul.u32 4, %s24
          %s2454 = ssub.s32 512, 512
          %2455 = vsyncadd %s2445, %s2454
          %s2456 = smul.addr %s23, 16
          %s2457 = sadd.s32 %s2452, %s2456
          %s2458 = smul.addr %s2457, 128
          %s2459 = scalar_lea.hbm %s3, %s2458
          %s2461 = sshll.u32 %s2448, 4
          %s2462 = int_to_ptr.vmem [resolvable:$true] %s2461
          %2464 = dma.vmem_to_hbm [thread:$0]  %s2462, 512, %s2459, %s2445
        $region52: #{tpu_custom_call.1} parent=31 // pred_fallthru
          _
      $region32: #{tpu_custom_call.1} parent=5 // pred_fallthru
        _
      %p2465 = scmp.le.s32.totalorder 2, %s14
      // Predicated region
      $region53: #{tpu_custom_call.1} parent=5 // pred_check
        %p2466 = pneg %p2465
      $region54: #{tpu_custom_call.1} parent=5 // pred_check_branch
        %2468 = sbr.rel (%p2466) target = $region56
      $region55: #{tpu_custom_call.1} parent=5 // pred_region
        %s2469 = ssub.s32 %s14, 2
        // Predicated region
        $region57: #{tpu_custom_call.1} parent=55 // pred_check
          %p2470 = pneg %p130
        $region58: #{tpu_custom_call.1} parent=55 // pred_check_branch
          %2472 = sbr.rel (%p2470) target = $region60
        $region59: #{tpu_custom_call.1} parent=55 // pred_region
          %s2473 = sand.u32 %s115, 1
          %s2474 = scalar_lea.sflag [#allocation5], %s2473
          %s2475 = sand.u32 %s115, 1
          %s2476 = smul.addr %s2475, 32
          %s2477 = scalar_lea.vmem [#allocation9], %s2476
          %2478 = dma.done %s2474, 512
        $region60: #{tpu_custom_call.1} parent=55 // pred_fallthru
          _
      $region56: #{tpu_custom_call.1} parent=5 // pred_fallthru
        _
    $region6: #{tpu_custom_call.1} parent=1 // loop_footer
      %s18 = sadd.s32 1, %s14
    $region7: #{tpu_custom_call.1} parent=1 // loop_footer_branch
      %13 = sbr.rel target = $region3
    $region8: #{tpu_custom_call.1} parent=1 // loop_exit
      _
    %2479 = vsyncpa [#allocation4], 1
    %s2480 = scalar_lea.sflag [#allocation4], 1
    %2481 = vsyncpa %s2480, 1
    %2482 = vsyncpa [#allocation7], 1
    %2483 = vsyncpa [#allocation5], 1
    %s2484 = scalar_lea.sflag [#allocation5], 1
    %2485 = vsyncpa %s2484, 1

</llo_original>
